<compile_context>
chip_gen: v7x
topology: tpu7x:2x2x1
jax: 0.10.0
libtpu: 0.0.40
codegen_flags: <defaults>
</compile_context>

<pallas_src>
import functools

import jax
import jax.numpy as jnp
from jax.experimental import pallas as pl
from jax.experimental.pallas import tpu as pltpu

NEG_SLOPE = 0.01  # PyTorch nn.LeakyReLU default


# ------------------------------ fused kernel --------------------------------

def _encoder_fused_kernel(pts_ref, start_ref, end_ref, *rest, n_point, n_latent):
    """One grid step of the fused encoder.

    rest layout:
      (w, b) * n_point            point layers (Linear + LeakyReLU)
      (w, b)                      final point Linear (no activation)
      (w, b) * n_latent           latent layers (Linear + LeakyReLU)
      (w, b)                      merged mu|logvar Linear
      out_ref                     [B, 2*latent_dim]
      acc_ref                     VMEM scratch [B, point_features] (segment sums)
    """
    out_ref, acc_ref = rest[-2], rest[-1]
    prm = rest[:-2]

    step = pl.program_id(0)
    tile_n = pts_ref.shape[0]
    num_segments = out_ref.shape[0]

    @pl.when(step == 0)
    def _init():
        acc_ref[...] = jnp.zeros_like(acc_ref)

    def leaky(y):
        return jnp.where(y >= 0.0, y, NEG_SLOPE * y)

    # ---- point encoding on this tile of points ----
    p = 0
    x = pts_ref[...]
    for _ in range(n_point):
        w, b = prm[p], prm[p + 1]; p += 2
        x = leaky(jnp.dot(x, w[...], preferred_element_type=jnp.float32) + b[...])
    w, b = prm[p], prm[p + 1]; p += 2
    x = jnp.dot(x, w[...], preferred_element_type=jnp.float32) + b[...]

    # ---- per-point-cloud segment sum via one masked MXU matmul ----
    starts = start_ref[...]                                     # [B, 1] int32
    ends = end_ref[...]                                         # [B, 1] int32
    col = (jax.lax.broadcasted_iota(jnp.int32, (num_segments, tile_n), 1)
           + step * tile_n)                                     # global column idx
    mask = ((col >= starts) & (col < ends)).astype(jnp.float32)  # [B, tile_n]
    acc_ref[...] += jnp.dot(mask, x, preferred_element_type=jnp.float32)

    # ---- finalize on the last tile: mean, latent MLP, merged mu|logvar ----
    @pl.when(step == pl.num_programs(0) - 1)
    def _finalize():
        counts = jnp.maximum((ends - starts).astype(jnp.float32), 1.0)
        latent = acc_ref[...] * pl.reciprocal(counts, approx=False)
        q = p
        for _ in range(n_latent):
            w2, b2 = prm[q], prm[q + 1]; q += 2
            latent = leaky(jnp.dot(latent, w2[...],
                                   preferred_element_type=jnp.float32) + b2[...])
        w2, b2 = prm[q], prm[q + 1]
        out = jnp.dot(latent, w2[...], preferred_element_type=jnp.float32) + b2[...]
        out_ref[...] = out.astype(out_ref.dtype)


# ------------------------- parameter initialization -------------------------

def init_linear(key, fan_in, fan_out):
    kw, kb = jax.random.split(key)
    bound = 1.0 / (fan_in ** 0.5)  # PyTorch nn.Linear default init range
    w = jax.random.uniform(kw, (fan_in, fan_out), jnp.float32, -bound, bound)
    b = jax.random.uniform(kb, (1, fan_out), jnp.float32, -bound, bound)
    return w, b


def init_encoder(key, in_features, latent_dim, point_layers, latent_layers):
    params = {"point": [], "latent": []}
    prev = in_features
    for f in point_layers:
        key, k = jax.random.split(key)
        params["point"].append(init_linear(k, prev, f))
        prev = f
    key, k = jax.random.split(key)
    params["point_final"] = init_linear(k, prev, prev)  # Linear(prev, prev), no act
    point_features = prev
    for f in latent_layers:
        key, k = jax.random.split(key)
        params["latent"].append(init_linear(k, prev, f))
        prev = f
    key, kmu = jax.random.split(key)
    key, klv = jax.random.split(key)
    w_mu, b_mu = init_linear(kmu, prev, latent_dim)
    w_lv, b_lv = init_linear(klv, prev, latent_dim)
    # Merged mu|logvar projection: one matmul, sliced on the host.
    params["mulogvar"] = (jnp.concatenate([w_mu, w_lv], axis=1),
                          jnp.concatenate([b_mu, b_lv], axis=1))
    return params, point_features


# --------------------------------- forward ----------------------------------

def encoder_forward(params, points, idx, *, tile_n=512):
    num_segments = int(idx.shape[0])
    latent_dim = params["mulogvar"][0].shape[1] // 2
    point_features = params["point_final"][0].shape[1]

    n, feat = points.shape
    # Tile along points: multiple of 8 (sublane), capped at N rounded up to 8.
    tile_n = max(8, min(int(tile_n), ((n + 7) // 8) * 8))
    tile_n = ((tile_n + 7) // 8) * 8
    n_pad = ((n + tile_n - 1) // tile_n) * tile_n
    if n_pad != n:
        # Zero rows are excluded by the segment mask (col >= last end offset).
        points = jnp.pad(points, ((0, n_pad - n), (0, 0)))
    grid = (n_pad // tile_n,)

    idx_i32 = idx.astype(jnp.int32)
    ends = idx_i32.reshape(num_segments, 1)
    starts = jnp.concatenate(
        [jnp.zeros((1,), jnp.int32), idx_i32[:-1]]).reshape(num_segments, 1)

    flat_params = []
    for w, b in params["point"]:
        flat_params += [w, b]
    flat_params += list(params["point_final"])
    for w, b in params["latent"]:
        flat_params += [w, b]
    flat_params += list(params["mulogvar"])

    # Points stream over the grid; everything else is a full-array VMEM block
    # with a constant index_map (stays resident, no re-DMA across grid steps).
    in_specs = [pl.BlockSpec((tile_n, feat), lambda i: (i, 0))]
    in_specs += [pl.BlockSpec(a.shape, lambda i: (0, 0))
                 for a in [starts, ends] + flat_params]

    out = pl.pallas_call(
        functools.partial(
            _encoder_fused_kernel,
            n_point=len(params["point"]),
            n_latent=len(params["latent"]),
        ),
        out_shape=jax.ShapeDtypeStruct((num_segments, 2 * latent_dim), jnp.float32),
        grid=grid,
        in_specs=in_specs,
        out_specs=pl.BlockSpec((num_segments, 2 * latent_dim), lambda i: (0, 0)),
        scratch_shapes=[pltpu.VMEM((num_segments, point_features), jnp.float32)],
        compiler_params=pltpu.CompilerParams(
            dimension_semantics=("arbitrary",)),  # N axis is a reduction
    )(points, starts, ends, *flat_params)

    return out[:, :latent_dim], out[:, latent_dim:]


# ---------------------------- pure-JAX reference ----------------------------

def ref_forward(params, points, idx):
    def lin(x, w, b, leaky):
        y = x @ w + b
        return jnp.where(y >= 0.0, y, NEG_SLOPE * y) if leaky else y

    x = points
    for w, b in params["point"]:
        x = lin(x, w, b, True)
    x = lin(x, *params["point_final"], False)

    n = x.shape[0]
    idx_i32 = idx.astype(jnp.int32)
    starts = jnp.concatenate([jnp.zeros((1,), jnp.int32), idx_i32[:-1]])
    col = jnp.arange(n)
    mask = ((col[None, :] >= starts[:, None]) &
            (col[None, :] < idx_i32[:, None])).astype(jnp.float32)   # [B, N]
    counts = jnp.maximum(mask.sum(axis=1, keepdims=True), 1.0)
    latent = (mask @ x) / counts

    for w, b in params["latent"]:
        latent = lin(latent, w, b, True)
    out = lin(latent, *params["mulogvar"], False)
    latent_dim = out.shape[1] // 2
    return out[:, :latent_dim], out[:, latent_dim:]


# ----------------------------------- main ------------------------------------

if __name__ == "__main__":
    in_features = 4
    latent_dim = 8
    point_layers = [32, 32]
    latent_layers = [32, 16]

    key = jax.random.PRNGKey(0)
    key, pkey, xkey = jax.random.split(key, 3)
    params, point_features = init_encoder(
        pkey, in_features, latent_dim, point_layers, latent_layers)

    # 3 point clouds with cumulative end offsets [0:40], [40:90], [90:120];
    # N=120 is NOT a multiple of the tile -> exercises host-side padding too.
    n_points = 120
    points = jax.random.normal(xkey, (n_points, in_features), jnp.float32)
    idx = jnp.array([40, 90, 120], dtype=jnp.int32)

    mu_ref, log_var_ref = ref_forward(params, points, idx)

    # Multi-step grid (tile_n=32 -> 4 grid steps, segments span tile boundaries).
    mu, log_var = encoder_forward(params, points, idx, tile_n=32)
    jax.block_until_ready((mu, log_var))
    assert mu.shape == (idx.shape[0], latent_dim)
    assert log_var.shape == (idx.shape[0], latent_dim)
    assert jnp.allclose(mu, mu_ref, atol=1e-5, rtol=1e-5)
    assert jnp.allclose(log_var, log_var_ref, atol=1e-5, rtol=1e-5)

    # Single-step grid (whole problem in one block) must give the same result.
    mu1, log_var1 = encoder_forward(params, points, idx, tile_n=512)
    jax.block_until_ready((mu1, log_var1))
    assert jnp.allclose(mu1, mu_ref, atol=1e-5, rtol=1e-5)
    assert jnp.allclose(log_var1, log_var_ref, atol=1e-5, rtol=1e-5)

    print("KERNEL_OK")
</pallas_src>

<mosaic_0001>
module attributes {stable_mosaic.version = 11 : i64} {
  func.func @_encoder_fused_kernel(%arg0: i32, %arg1: memref<32x4xf32, #tpu.memory_space<vmem>>, %arg2: memref<3x1xi32, #tpu.memory_space<vmem>>, %arg3: memref<3x1xi32, #tpu.memory_space<vmem>>, %arg4: memref<4x32xf32, #tpu.memory_space<vmem>>, %arg5: memref<1x32xf32, #tpu.memory_space<vmem>>, %arg6: memref<32x32xf32, #tpu.memory_space<vmem>>, %arg7: memref<1x32xf32, #tpu.memory_space<vmem>>, %arg8: memref<32x32xf32, #tpu.memory_space<vmem>>, %arg9: memref<1x32xf32, #tpu.memory_space<vmem>>, %arg10: memref<32x32xf32, #tpu.memory_space<vmem>>, %arg11: memref<1x32xf32, #tpu.memory_space<vmem>>, %arg12: memref<32x16xf32, #tpu.memory_space<vmem>>, %arg13: memref<1x16xf32, #tpu.memory_space<vmem>>, %arg14: memref<16x16xf32, #tpu.memory_space<vmem>>, %arg15: memref<1x16xf32, #tpu.memory_space<vmem>>, %arg16: memref<3x16xf32, #tpu.memory_space<vmem>>, %arg17: memref<3x32xf32, #tpu.memory_space<vmem>>) attributes {dimension_semantics = [#tpu.dimension_semantics<arbitrary>], iteration_bounds = array<i64: 4>, scalar_prefetch = 0 : i64, scratch_operands = 1 : i64, tpu.core_type = #tpu.core_type<tc>, window_params = [{transform_indices = @transform_0, window_bounds = array<i64: 32, 4>}, {pipeline_mode = #tpu.pipeline_mode<synchronous>, transform_indices = @transform_1, window_bounds = array<i64: 3, 1>}, {pipeline_mode = #tpu.pipeline_mode<synchronous>, transform_indices = @transform_2, window_bounds = array<i64: 3, 1>}, {pipeline_mode = #tpu.pipeline_mode<synchronous>, transform_indices = @transform_3, window_bounds = array<i64: 4, 32>}, {pipeline_mode = #tpu.pipeline_mode<synchronous>, transform_indices = @transform_4, window_bounds = array<i64: 1, 32>}, {pipeline_mode = #tpu.pipeline_mode<synchronous>, transform_indices = @transform_5, window_bounds = array<i64: 32, 32>}, {pipeline_mode = #tpu.pipeline_mode<synchronous>, transform_indices = @transform_6, window_bounds = array<i64: 1, 32>}, {pipeline_mode = #tpu.pipeline_mode<synchronous>, transform_indices = @transform_7, window_bounds = array<i64: 32, 32>}, {pipeline_mode = #tpu.pipeline_mode<synchronous>, transform_indices = @transform_8, window_bounds = array<i64: 1, 32>}, {pipeline_mode = #tpu.pipeline_mode<synchronous>, transform_indices = @transform_9, window_bounds = array<i64: 32, 32>}, {pipeline_mode = #tpu.pipeline_mode<synchronous>, transform_indices = @transform_10, window_bounds = array<i64: 1, 32>}, {pipeline_mode = #tpu.pipeline_mode<synchronous>, transform_indices = @transform_11, window_bounds = array<i64: 32, 16>}, {pipeline_mode = #tpu.pipeline_mode<synchronous>, transform_indices = @transform_12, window_bounds = array<i64: 1, 16>}, {pipeline_mode = #tpu.pipeline_mode<synchronous>, transform_indices = @transform_13, window_bounds = array<i64: 16, 16>}, {pipeline_mode = #tpu.pipeline_mode<synchronous>, transform_indices = @transform_14, window_bounds = array<i64: 1, 16>}, {pipeline_mode = #tpu.pipeline_mode<synchronous>, transform_indices = @transform_15, window_bounds = array<i64: 3, 16>}]} {
    %c0_i32 = arith.constant 0 : i32
    %0 = arith.cmpi eq, %arg0, %c0_i32 : i32
    %1 = arith.extui %0 : i1 to i32
    %c0_i32_0 = arith.constant 0 : i32
    %2 = arith.cmpi ne, %1, %c0_i32_0 : i32
    scf.if %2 {
      %cst_30 = arith.constant 0.000000e+00 : f32
      %49 = vector.broadcast %cst_30 : f32 to vector<3x32xf32>
      %c0_31 = arith.constant 0 : index
      %c0_32 = arith.constant 0 : index
      %50 = vector.load %arg17[%c0_31, %c0_32] : memref<3x32xf32, #tpu.memory_space<vmem>>, vector<3x32xf32>
      tpu.vector_store %arg17[%c0_31, %c0_32], %49 {strides = array<i32>} : memref<3x32xf32, #tpu.memory_space<vmem>>, vector<3x32xf32>,
    } else {
    }
    %c0 = arith.constant 0 : index
    %c0_1 = arith.constant 0 : index
    %3 = vector.load %arg1[%c0, %c0_1] : memref<32x4xf32, #tpu.memory_space<vmem>>, vector<32x4xf32>
    %c0_2 = arith.constant 0 : index
    %c0_3 = arith.constant 0 : index
    %4 = vector.load %arg4[%c0_2, %c0_3] : memref<4x32xf32, #tpu.memory_space<vmem>>, vector<4x32xf32>
    %cst = arith.constant dense<0.000000e+00> : vector<32x32xf32>
    %5 = tpu.matmul %3, %4, %cst {dimension_numbers = #tpu.dot_dimension_numbers<[1], [0], [0], [1], [0, 0, 1, 1], [], []>} : vector<32x4xf32>, vector<4x32xf32>, vector<32x32xf32> -> vector<32x32xf32>
    %c0_4 = arith.constant 0 : index
    %c0_5 = arith.constant 0 : index
    %6 = vector.load %arg5[%c0_4, %c0_5] : memref<1x32xf32, #tpu.memory_space<vmem>>, vector<1x32xf32>
    %7 = vector.broadcast %6 : vector<1x32xf32> to vector<32x32xf32>
    %8 = arith.addf %5, %7 : vector<32x32xf32>
    %cst_6 = arith.constant 0.000000e+00 : f32
    %9 = vector.broadcast %cst_6 : f32 to vector<32x32xf32>
    %10 = arith.cmpf oge, %8, %9 : vector<32x32xf32>
    %cst_7 = arith.constant 0.00999999977 : f32
    %11 = vector.broadcast %cst_7 : f32 to vector<32x32xf32>
    %12 = arith.mulf %11, %8 : vector<32x32xf32>
    %13 = arith.select %10, %8, %12 : vector<32x32xi1>, vector<32x32xf32>
    %c0_8 = arith.constant 0 : index
    %c0_9 = arith.constant 0 : index
    %14 = vector.load %arg6[%c0_8, %c0_9] : memref<32x32xf32, #tpu.memory_space<vmem>>, vector<32x32xf32>
    %cst_10 = arith.constant dense<0.000000e+00> : vector<32x32xf32>
    %15 = tpu.matmul %13, %14, %cst_10 {dimension_numbers = #tpu.dot_dimension_numbers<[1], [0], [0], [1], [0, 0, 1, 1], [], []>} : vector<32x32xf32>, vector<32x32xf32>, vector<32x32xf32> -> vector<32x32xf32>
    %c0_11 = arith.constant 0 : index
    %c0_12 = arith.constant 0 : index
    %16 = vector.load %arg7[%c0_11, %c0_12] : memref<1x32xf32, #tpu.memory_space<vmem>>, vector<1x32xf32>
    %17 = vector.broadcast %16 : vector<1x32xf32> to vector<32x32xf32>
    %18 = arith.addf %15, %17 : vector<32x32xf32>
    %cst_13 = arith.constant 0.000000e+00 : f32
    %19 = vector.broadcast %cst_13 : f32 to vector<32x32xf32>
    %20 = arith.cmpf oge, %18, %19 : vector<32x32xf32>
    %cst_14 = arith.constant 0.00999999977 : f32
    %21 = vector.broadcast %cst_14 : f32 to vector<32x32xf32>
    %22 = arith.mulf %21, %18 : vector<32x32xf32>
    %23 = arith.select %20, %18, %22 : vector<32x32xi1>, vector<32x32xf32>
    %c0_15 = arith.constant 0 : index
    %c0_16 = arith.constant 0 : index
    %24 = vector.load %arg8[%c0_15, %c0_16] : memref<32x32xf32, #tpu.memory_space<vmem>>, vector<32x32xf32>
    %cst_17 = arith.constant dense<0.000000e+00> : vector<32x32xf32>
    %25 = tpu.matmul %23, %24, %cst_17 {dimension_numbers = #tpu.dot_dimension_numbers<[1], [0], [0], [1], [0, 0, 1, 1], [], []>} : vector<32x32xf32>, vector<32x32xf32>, vector<32x32xf32> -> vector<32x32xf32>
    %c0_18 = arith.constant 0 : index
    %c0_19 = arith.constant 0 : index
    %26 = vector.load %arg9[%c0_18, %c0_19] : memref<1x32xf32, #tpu.memory_space<vmem>>, vector<1x32xf32>
    %27 = vector.broadcast %26 : vector<1x32xf32> to vector<32x32xf32>
    %28 = arith.addf %25, %27 : vector<32x32xf32>
    %c0_20 = arith.constant 0 : index
    %c0_21 = arith.constant 0 : index
    %29 = vector.load %arg2[%c0_20, %c0_21] : memref<3x1xi32, #tpu.memory_space<vmem>>, vector<3x1xi32>
    %c0_22 = arith.constant 0 : index
    %c0_23 = arith.constant 0 : index
    %30 = vector.load %arg3[%c0_22, %c0_23] : memref<3x1xi32, #tpu.memory_space<vmem>>, vector<3x1xi32>
    %31 = tpu.iota {dimensions = array<i32: 1>} : vector<3x32xi32>
    %c32_i32 = arith.constant 32 : i32
    %32 = arith.muli %arg0, %c32_i32 : i32
    %33 = vector.broadcast %32 : i32 to vector<3x32xi32>
    %34 = arith.addi %31, %33 : vector<3x32xi32>
    %35 = vector.broadcast %29 : vector<3x1xi32> to vector<3x32xi32>
    %36 = arith.cmpi sge, %34, %35 : vector<3x32xi32>
    %37 = vector.broadcast %30 : vector<3x1xi32> to vector<3x32xi32>
    %38 = arith.cmpi slt, %34, %37 : vector<3x32xi32>
    %39 = arith.andi %36, %38 : vector<3x32xi1>
    %40 = arith.extui %39 : vector<3x32xi1> to vector<3x32xi32>
    %41 = arith.sitofp %40 : vector<3x32xi32> to vector<3x32xf32>
    %c0_24 = arith.constant 0 : index
    %c0_25 = arith.constant 0 : index
    %42 = vector.load %arg17[%c0_24, %c0_25] : memref<3x32xf32, #tpu.memory_space<vmem>>, vector<3x32xf32>
    %cst_26 = arith.constant dense<0.000000e+00> : vector<3x32xf32>
    %43 = tpu.matmul %41, %28, %cst_26 {dimension_numbers = #tpu.dot_dimension_numbers<[1], [0], [0], [1], [0, 0, 1, 1], [], []>} : vector<3x32xf32>, vector<32x32xf32>, vector<3x32xf32> -> vector<3x32xf32>
    %44 = arith.addf %42, %43 : vector<3x32xf32>
    %c0_27 = arith.constant 0 : index
    %c0_28 = arith.constant 0 : index
    %45 = vector.load %arg17[%c0_27, %c0_28] : memref<3x32xf32, #tpu.memory_space<vmem>>, vector<3x32xf32>
    tpu.vector_store %arg17[%c0_27, %c0_28], %44 {strides = array<i32>} : memref<3x32xf32, #tpu.memory_space<vmem>>, vector<3x32xf32>,
    %c3_i32 = arith.constant 3 : i32
    %46 = arith.cmpi eq, %arg0, %c3_i32 : i32
    %47 = arith.extui %46 : i1 to i32
    %c0_i32_29 = arith.constant 0 : i32
    %48 = arith.cmpi ne, %47, %c0_i32_29 : i32
    scf.if %48 {
      %49 = arith.subi %30, %29 : vector<3x1xi32>
      %50 = arith.sitofp %49 : vector<3x1xi32> to vector<3x1xf32>
      %cst_30 = arith.constant 1.000000e+00 : f32
      %51 = vector.broadcast %cst_30 : f32 to vector<3x1xf32>
      %52 = arith.maximumf %50, %51 : vector<3x1xf32>
      %c0_31 = arith.constant 0 : index
      %c0_32 = arith.constant 0 : index
      %53 = vector.load %arg17[%c0_31, %c0_32] : memref<3x32xf32, #tpu.memory_space<vmem>>, vector<3x32xf32>
      %54 = tpu.reciprocal %52 : vector<3x1xf32> -> vector<3x1xf32>
      %55 = vector.broadcast %54 : vector<3x1xf32> to vector<3x32xf32>
      %56 = arith.mulf %53, %55 : vector<3x32xf32>
      %c0_33 = arith.constant 0 : index
      %c0_34 = arith.constant 0 : index
      %57 = vector.load %arg10[%c0_33, %c0_34] : memref<32x32xf32, #tpu.memory_space<vmem>>, vector<32x32xf32>
      %cst_35 = arith.constant dense<0.000000e+00> : vector<3x32xf32>
      %58 = tpu.matmul %56, %57, %cst_35 {dimension_numbers = #tpu.dot_dimension_numbers<[1], [0], [0], [1], [0, 0, 1, 1], [], []>} : vector<3x32xf32>, vector<32x32xf32>, vector<3x32xf32> -> vector<3x32xf32>
      %c0_36 = arith.constant 0 : index
      %c0_37 = arith.constant 0 : index
      %59 = vector.load %arg11[%c0_36, %c0_37] : memref<1x32xf32, #tpu.memory_space<vmem>>, vector<1x32xf32>
      %60 = vector.broadcast %59 : vector<1x32xf32> to vector<3x32xf32>
      %61 = arith.addf %58, %60 : vector<3x32xf32>
      %cst_38 = arith.constant 0.000000e+00 : f32
      %62 = vector.broadcast %cst_38 : f32 to vector<3x32xf32>
      %63 = arith.cmpf oge, %61, %62 : vector<3x32xf32>
      %cst_39 = arith.constant 0.00999999977 : f32
      %64 = vector.broadcast %cst_39 : f32 to vector<3x32xf32>
      %65 = arith.mulf %64, %61 : vector<3x32xf32>
      %66 = arith.select %63, %61, %65 : vector<3x32xi1>, vector<3x32xf32>
      %c0_40 = arith.constant 0 : index
      %c0_41 = arith.constant 0 : index
      %67 = vector.load %arg12[%c0_40, %c0_41] : memref<32x16xf32, #tpu.memory_space<vmem>>, vector<32x16xf32>
      %cst_42 = arith.constant dense<0.000000e+00> : vector<3x16xf32>
      %68 = tpu.matmul %66, %67, %cst_42 {dimension_numbers = #tpu.dot_dimension_numbers<[1], [0], [0], [1], [0, 0, 1, 1], [], []>} : vector<3x32xf32>, vector<32x16xf32>, vector<3x16xf32> -> vector<3x16xf32>
      %c0_43 = arith.constant 0 : index
      %c0_44 = arith.constant 0 : index
      %69 = vector.load %arg13[%c0_43, %c0_44] : memref<1x16xf32, #tpu.memory_space<vmem>>, vector<1x16xf32>
      %70 = vector.broadcast %69 : vector<1x16xf32> to vector<3x16xf32>
      %71 = arith.addf %68, %70 : vector<3x16xf32>
      %cst_45 = arith.constant 0.000000e+00 : f32
      %72 = vector.broadcast %cst_45 : f32 to vector<3x16xf32>
      %73 = arith.cmpf oge, %71, %72 : vector<3x16xf32>
      %cst_46 = arith.constant 0.00999999977 : f32
      %74 = vector.broadcast %cst_46 : f32 to vector<3x16xf32>
      %75 = arith.mulf %74, %71 : vector<3x16xf32>
      %76 = arith.select %73, %71, %75 : vector<3x16xi1>, vector<3x16xf32>
      %c0_47 = arith.constant 0 : index
      %c0_48 = arith.constant 0 : index
      %77 = vector.load %arg14[%c0_47, %c0_48] : memref<16x16xf32, #tpu.memory_space<vmem>>, vector<16x16xf32>
      %cst_49 = arith.constant dense<0.000000e+00> : vector<3x16xf32>
      %78 = tpu.matmul %76, %77, %cst_49 {dimension_numbers = #tpu.dot_dimension_numbers<[1], [0], [0], [1], [0, 0, 1, 1], [], []>} : vector<3x16xf32>, vector<16x16xf32>, vector<3x16xf32> -> vector<3x16xf32>
      %c0_50 = arith.constant 0 : index
      %c0_51 = arith.constant 0 : index
      %79 = vector.load %arg15[%c0_50, %c0_51] : memref<1x16xf32, #tpu.memory_space<vmem>>, vector<1x16xf32>
      %80 = vector.broadcast %79 : vector<1x16xf32> to vector<3x16xf32>
      %81 = arith.addf %78, %80 : vector<3x16xf32>
      %c0_52 = arith.constant 0 : index
      %c0_53 = arith.constant 0 : index
      %82 = vector.load %arg16[%c0_52, %c0_53] : memref<3x16xf32, #tpu.memory_space<vmem>>, vector<3x16xf32>
      tpu.vector_store %arg16[%c0_52, %c0_53], %81 {strides = array<i32>} : memref<3x16xf32, #tpu.memory_space<vmem>>, vector<3x16xf32>,
    } else {
    }
    return
  }
  func.func @transform_0(%arg0: i32) -> (i32, i32) {
    %c0_i32 = arith.constant 0 : i32
    %c0_i32_0 = arith.constant 0 : i32
    return %arg0, %c0_i32 : i32, i32
  }
  func.func @transform_1(%arg0: i32) -> (i32, i32) {
    %c0_i32 = arith.constant 0 : i32
    %c0_i32_0 = arith.constant 0 : i32
    %c0_i32_1 = arith.constant 0 : i32
    return %c0_i32, %c0_i32_0 : i32, i32
  }
  func.func @transform_2(%arg0: i32) -> (i32, i32) {
    %c0_i32 = arith.constant 0 : i32
    %c0_i32_0 = arith.constant 0 : i32
    %c0_i32_1 = arith.constant 0 : i32
    return %c0_i32, %c0_i32_0 : i32, i32
  }
  func.func @transform_3(%arg0: i32) -> (i32, i32) {
    %c0_i32 = arith.constant 0 : i32
    %c0_i32_0 = arith.constant 0 : i32
    %c0_i32_1 = arith.constant 0 : i32
    return %c0_i32, %c0_i32_0 : i32, i32
  }
  func.func @transform_4(%arg0: i32) -> (i32, i32) {
    %c0_i32 = arith.constant 0 : i32
    %c0_i32_0 = arith.constant 0 : i32
    %c0_i32_1 = arith.constant 0 : i32
    return %c0_i32, %c0_i32_0 : i32, i32
  }
  func.func @transform_5(%arg0: i32) -> (i32, i32) {
    %c0_i32 = arith.constant 0 : i32
    %c0_i32_0 = arith.constant 0 : i32
    %c0_i32_1 = arith.constant 0 : i32
    return %c0_i32, %c0_i32_0 : i32, i32
  }
  func.func @transform_6(%arg0: i32) -> (i32, i32) {
    %c0_i32 = arith.constant 0 : i32
    %c0_i32_0 = arith.constant 0 : i32
    %c0_i32_1 = arith.constant 0 : i32
    return %c0_i32, %c0_i32_0 : i32, i32
  }
  func.func @transform_7(%arg0: i32) -> (i32, i32) {
    %c0_i32 = arith.constant 0 : i32
    %c0_i32_0 = arith.constant 0 : i32
    %c0_i32_1 = arith.constant 0 : i32
    return %c0_i32, %c0_i32_0 : i32, i32
  }
  func.func @transform_8(%arg0: i32) -> (i32, i32) {
    %c0_i32 = arith.constant 0 : i32
    %c0_i32_0 = arith.constant 0 : i32
    %c0_i32_1 = arith.constant 0 : i32
    return %c0_i32, %c0_i32_0 : i32, i32
  }
  func.func @transform_9(%arg0: i32) -> (i32, i32) {
    %c0_i32 = arith.constant 0 : i32
    %c0_i32_0 = arith.constant 0 : i32
    %c0_i32_1 = arith.constant 0 : i32
    return %c0_i32, %c0_i32_0 : i32, i32
  }
  func.func @transform_10(%arg0: i32) -> (i32, i32) {
    %c0_i32 = arith.constant 0 : i32
    %c0_i32_0 = arith.constant 0 : i32
    %c0_i32_1 = arith.constant 0 : i32
    return %c0_i32, %c0_i32_0 : i32, i32
  }
  func.func @transform_11(%arg0: i32) -> (i32, i32) {
    %c0_i32 = arith.constant 0 : i32
    %c0_i32_0 = arith.constant 0 : i32
    %c0_i32_1 = arith.constant 0 : i32
    return %c0_i32, %c0_i32_0 : i32, i32
  }
  func.func @transform_12(%arg0: i32) -> (i32, i32) {
    %c0_i32 = arith.constant 0 : i32
    %c0_i32_0 = arith.constant 0 : i32
    %c0_i32_1 = arith.constant 0 : i32
    return %c0_i32, %c0_i32_0 : i32, i32
  }
  func.func @transform_13(%arg0: i32) -> (i32, i32) {
    %c0_i32 = arith.constant 0 : i32
    %c0_i32_0 = arith.constant 0 : i32
    %c0_i32_1 = arith.constant 0 : i32
    return %c0_i32, %c0_i32_0 : i32, i32
  }
  func.func @transform_14(%arg0: i32) -> (i32, i32) {
    %c0_i32 = arith.constant 0 : i32
    %c0_i32_0 = arith.constant 0 : i32
    %c0_i32_1 = arith.constant 0 : i32
    return %c0_i32, %c0_i32_0 : i32, i32
  }
  func.func @transform_15(%arg0: i32) -> (i32, i32) {
    %c0_i32 = arith.constant 0 : i32
    %c0_i32_0 = arith.constant 0 : i32
    %c0_i32_1 = arith.constant 0 : i32
    return %c0_i32, %c0_i32_0 : i32, i32
  }
}

</mosaic_0001>

<llo_original>
// kernel: tpu_custom_call.1
$region0: #{tpu_custom_call.1}
  #allocation0 [shape = 'u32[]', space=smem, size = 0x4, offset = 0x4, fixed_abs, tag = 'smem constant byte address 0x4 - core index']
  #allocation1 [shape = 'u32[144,128]{1,0:T(1,128)}', space=vmem, size = 0x12000, scoped, tag = 'internal scratch']
  #allocation2 [shape = 'f32[3,32]{1,0:T(4,128)}', space=vmem, size = 0x800, scoped, tag = 'scratch operand']
  %s0 = inlined_call_operand.vmem [shape: f32[128,4], index: 0, kind: input, shape index: {}]
  %s1 = inlined_call_operand.vmem [shape: s32[3,1], index: 1, kind: input, shape index: {}]
  %s2 = inlined_call_operand.vmem [shape: s32[3,1], index: 2, kind: input, shape index: {}]
  %s3 = inlined_call_operand.vmem [shape: f32[4,32], index: 3, kind: input, shape index: {}]
  %s4 = inlined_call_operand.vmem [shape: f32[1,32], index: 4, kind: input, shape index: {}]
  %s5 = inlined_call_operand.vmem [shape: f32[32,32], index: 5, kind: input, shape index: {}]
  %s6 = inlined_call_operand.vmem [shape: f32[1,32], index: 6, kind: input, shape index: {}]
  %s7 = inlined_call_operand.vmem [shape: f32[32,32], index: 7, kind: input, shape index: {}]
  %s8 = inlined_call_operand.vmem [shape: f32[1,32], index: 8, kind: input, shape index: {}]
  %s9 = inlined_call_operand.vmem [shape: f32[32,32], index: 9, kind: input, shape index: {}]
  %s10 = inlined_call_operand.vmem [shape: f32[1,32], index: 10, kind: input, shape index: {}]
  %s11 = inlined_call_operand.vmem [shape: f32[32,16], index: 11, kind: input, shape index: {}]
  %s12 = inlined_call_operand.vmem [shape: f32[1,16], index: 12, kind: input, shape index: {}]
  %s13 = inlined_call_operand.vmem [shape: f32[16,16], index: 13, kind: input, shape index: {}]
  %s14 = inlined_call_operand.vmem [shape: f32[1,16], index: 14, kind: input, shape index: {}]
  %s15 = inlined_call_operand.hbm [shape: f32[3,16], index: 15, kind: output, shape index: {}]
  %s16 = sld [smem:[#allocation0]]
  $region101: #{tpu_custom_call.1} parent=0
    _
  %s18 = ssub.s32 1, %s16
  %s19 = scalar_select 0, %s18, %s16
  $region1: #{tpu_custom_call.1} parent=0
    #allocation3 [shape = 'u8[2048]{0}', space=vmem, size = 0x800, scoped, tag = 'output window, operand 0, single buffered']
    #allocation4 [shape = 's32[2]{0}', space=sflag, size = 0x8, scoped, tag = 'scoped memory for tpu_custom_call.1']
    %20 = vsyncpa [#allocation4], 0
    loop: start=0, step=1, limit=6
    $region2: #{tpu_custom_call.1} parent=1 // loop_pre_header
      _
    $region3: #{tpu_custom_call.1} parent=1 // loop_header
      %s22 = sphi 0, %s26
      %p23 = scmp.ge.s32.totalorder %s22, 6
      %s32 = sphi 0, %s34
      %s35 = sphi 0, %s32
      %s36 = sphi 0, %s35
      %s52 = sphi 0, %s36
      %s56 = sphi 0, %s56
      %s58 = sphi 0, %s56
      %s59 = sphi 0, %s58
      %s73 = sphi 0, %s59
      %s77 = sphi 0, %s77
      %s79 = sphi 0, %s77
      %s80 = sphi 0, %s79
      %s94 = sphi 0, %s80
      %s98 = sphi 0, %s98
      %s100 = sphi 0, %s98
      %s101 = sphi 0, %s100
      %s115 = sphi 0, %s101
      %s119 = sphi 0, %s119
      %s121 = sphi 0, %s119
      %s122 = sphi 0, %s121
      %s136 = sphi 0, %s122
      %s140 = sphi 0, %s140
      %s142 = sphi 0, %s140
      %s143 = sphi 0, %s142
      %s157 = sphi 0, %s143
      %s161 = sphi 0, %s161
      %s163 = sphi 0, %s161
      %s164 = sphi 0, %s163
      %s178 = sphi 0, %s164
      %s182 = sphi 0, %s182
      %s184 = sphi 0, %s182
      %s185 = sphi 0, %s184
      %s199 = sphi 0, %s185
      %s203 = sphi 0, %s203
      %s205 = sphi 0, %s203
      %s206 = sphi 0, %s205
      %s220 = sphi 0, %s206
      %s224 = sphi 0, %s224
      %s226 = sphi 0, %s224
      %s227 = sphi 0, %s226
      %s241 = sphi 0, %s227
      %s245 = sphi 0, %s245
      %s247 = sphi 0, %s245
      %s248 = sphi 0, %s247
      %s262 = sphi 0, %s248
      %s266 = sphi 0, %s266
      %s268 = sphi 0, %s266
      %s269 = sphi 0, %s268
      %s283 = sphi 0, %s269
      %s287 = sphi 0, %s287
      %s289 = sphi 0, %s287
      %s290 = sphi 0, %s289
      %s304 = sphi 0, %s290
      %s308 = sphi 0, %s308
      %s310 = sphi 0, %s308
      %s311 = sphi 0, %s310
      %s325 = sphi 0, %s311
      %s329 = sphi 0, %s329
      %s331 = sphi 0, %s329
      %s332 = sphi 0, %s331
      %s346 = sphi 0, %s332
      %s350 = sphi 0, %s350
      %s352 = sphi 0, %s350
      %s353 = sphi 0, %s352
      %s367 = sphi 0, %s353
    $region4: #{tpu_custom_call.1} parent=1 // loop_header_branch
      %25 = sbr.rel (%p23) target = $region8
    $region5: #{tpu_custom_call.1} parent=1 // loop_body
      %s27 = ssub.s32 %s22, 1
      %s28 = ssub.s32 %s22, 2
      %s29 = sadd.s32 %s22, 1
      %s30 = ssub.s32 %s22, %s29
      %p31 = scmp.eq.s32.totalorder %s30, 0
      %s33 = sadd.s32 %s32, 1
      %s34 = scalar_select %p31, %s32, %s33
      %p37 = pneg %p31
      %p38 = scmp.eq.s32.totalorder %s22, 3
      %p39 = por %p37, %p38
      %p40 = scmp.ne.s32.totalorder %s32, %s35
      %p41 = scmp.eq.s32.totalorder %s22, 0
      %p42 = por %p40, %p41
      %p43 = scmp.ne.s32.totalorder %s32, %s35
      %p44 = scmp.eq.s32.totalorder %s27, 3
      %p45 = por %p43, %p44
      %p46 = scmp.ne.s32.totalorder %s35, %s36
      %p47 = scmp.eq.s32.totalorder %s27, 0
      %p48 = por %p46, %p47
      %p49 = scmp.ne.s32.totalorder %s35, %s36
      %p50 = scmp.eq.s32.totalorder %s28, 3
      %p51 = por %p49, %p50
      %p53 = scmp.ne.s32.totalorder %s36, %s52
      %p54 = scmp.eq.s32.totalorder %s28, 0
      %p55 = por %p53, %p54
      %s57 = sadd.s32 %s56, 1
      %p60 = scmp.eq.s32.totalorder %s22, 3
      %p61 = scmp.ne.s32.totalorder %s56, %s58
      %p62 = scmp.eq.s32.totalorder %s22, 0
      %p63 = por %p61, %p62
      %p64 = scmp.ne.s32.totalorder %s56, %s58
      %p65 = scmp.eq.s32.totalorder %s27, 3
      %p66 = por %p64, %p65
      %p67 = scmp.ne.s32.totalorder %s58, %s59
      %p68 = scmp.eq.s32.totalorder %s27, 0
      %p69 = por %p67, %p68
      %p70 = scmp.ne.s32.totalorder %s58, %s59
      %p71 = scmp.eq.s32.totalorder %s28, 3
      %p72 = por %p70, %p71
      %p74 = scmp.ne.s32.totalorder %s59, %s73
      %p75 = scmp.eq.s32.totalorder %s28, 0
      %p76 = por %p74, %p75
      %s78 = sadd.s32 %s77, 1
      %p81 = scmp.eq.s32.totalorder %s22, 3
      %p82 = scmp.ne.s32.totalorder %s77, %s79
      %p83 = scmp.eq.s32.totalorder %s22, 0
      %p84 = por %p82, %p83
      %p85 = scmp.ne.s32.totalorder %s77, %s79
      %p86 = scmp.eq.s32.totalorder %s27, 3
      %p87 = por %p85, %p86
      %p88 = scmp.ne.s32.totalorder %s79, %s80
      %p89 = scmp.eq.s32.totalorder %s27, 0
      %p90 = por %p88, %p89
      %p91 = scmp.ne.s32.totalorder %s79, %s80
      %p92 = scmp.eq.s32.totalorder %s28, 3
      %p93 = por %p91, %p92
      %p95 = scmp.ne.s32.totalorder %s80, %s94
      %p96 = scmp.eq.s32.totalorder %s28, 0
      %p97 = por %p95, %p96
      %s99 = sadd.s32 %s98, 1
      %p102 = scmp.eq.s32.totalorder %s22, 3
      %p103 = scmp.ne.s32.totalorder %s98, %s100
      %p104 = scmp.eq.s32.totalorder %s22, 0
      %p105 = por %p103, %p104
      %p106 = scmp.ne.s32.totalorder %s98, %s100
      %p107 = scmp.eq.s32.totalorder %s27, 3
      %p108 = por %p106, %p107
      %p109 = scmp.ne.s32.totalorder %s100, %s101
      %p110 = scmp.eq.s32.totalorder %s27, 0
      %p111 = por %p109, %p110
      %p112 = scmp.ne.s32.totalorder %s100, %s101
      %p113 = scmp.eq.s32.totalorder %s28, 3
      %p114 = por %p112, %p113
      %p116 = scmp.ne.s32.totalorder %s101, %s115
      %p117 = scmp.eq.s32.totalorder %s28, 0
      %p118 = por %p116, %p117
      %s120 = sadd.s32 %s119, 1
      %p123 = scmp.eq.s32.totalorder %s22, 3
      %p124 = scmp.ne.s32.totalorder %s119, %s121
      %p125 = scmp.eq.s32.totalorder %s22, 0
      %p126 = por %p124, %p125
      %p127 = scmp.ne.s32.totalorder %s119, %s121
      %p128 = scmp.eq.s32.totalorder %s27, 3
      %p129 = por %p127, %p128
      %p130 = scmp.ne.s32.totalorder %s121, %s122
      %p131 = scmp.eq.s32.totalorder %s27, 0
      %p132 = por %p130, %p131
      %p133 = scmp.ne.s32.totalorder %s121, %s122
      %p134 = scmp.eq.s32.totalorder %s28, 3
      %p135 = por %p133, %p134
      %p137 = scmp.ne.s32.totalorder %s122, %s136
      %p138 = scmp.eq.s32.totalorder %s28, 0
      %p139 = por %p137, %p138
      %s141 = sadd.s32 %s140, 1
      %p144 = scmp.eq.s32.totalorder %s22, 3
      %p145 = scmp.ne.s32.totalorder %s140, %s142
      %p146 = scmp.eq.s32.totalorder %s22, 0
      %p147 = por %p145, %p146
      %p148 = scmp.ne.s32.totalorder %s140, %s142
      %p149 = scmp.eq.s32.totalorder %s27, 3
      %p150 = por %p148, %p149
      %p151 = scmp.ne.s32.totalorder %s142, %s143
      %p152 = scmp.eq.s32.totalorder %s27, 0
      %p153 = por %p151, %p152
      %p154 = scmp.ne.s32.totalorder %s142, %s143
      %p155 = scmp.eq.s32.totalorder %s28, 3
      %p156 = por %p154, %p155
      %p158 = scmp.ne.s32.totalorder %s143, %s157
      %p159 = scmp.eq.s32.totalorder %s28, 0
      %p160 = por %p158, %p159
      %s162 = sadd.s32 %s161, 1
      %p165 = scmp.eq.s32.totalorder %s22, 3
      %p166 = scmp.ne.s32.totalorder %s161, %s163
      %p167 = scmp.eq.s32.totalorder %s22, 0
      %p168 = por %p166, %p167
      %p169 = scmp.ne.s32.totalorder %s161, %s163
      %p170 = scmp.eq.s32.totalorder %s27, 3
      %p171 = por %p169, %p170
      %p172 = scmp.ne.s32.totalorder %s163, %s164
      %p173 = scmp.eq.s32.totalorder %s27, 0
      %p174 = por %p172, %p173
      %p175 = scmp.ne.s32.totalorder %s163, %s164
      %p176 = scmp.eq.s32.totalorder %s28, 3
      %p177 = por %p175, %p176
      %p179 = scmp.ne.s32.totalorder %s164, %s178
      %p180 = scmp.eq.s32.totalorder %s28, 0
      %p181 = por %p179, %p180
      %s183 = sadd.s32 %s182, 1
      %p186 = scmp.eq.s32.totalorder %s22, 3
      %p187 = scmp.ne.s32.totalorder %s182, %s184
      %p188 = scmp.eq.s32.totalorder %s22, 0
      %p189 = por %p187, %p188
      %p190 = scmp.ne.s32.totalorder %s182, %s184
      %p191 = scmp.eq.s32.totalorder %s27, 3
      %p192 = por %p190, %p191
      %p193 = scmp.ne.s32.totalorder %s184, %s185
      %p194 = scmp.eq.s32.totalorder %s27, 0
      %p195 = por %p193, %p194
      %p196 = scmp.ne.s32.totalorder %s184, %s185
      %p197 = scmp.eq.s32.totalorder %s28, 3
      %p198 = por %p196, %p197
      %p200 = scmp.ne.s32.totalorder %s185, %s199
      %p201 = scmp.eq.s32.totalorder %s28, 0
      %p202 = por %p200, %p201
      %s204 = sadd.s32 %s203, 1
      %p207 = scmp.eq.s32.totalorder %s22, 3
      %p208 = scmp.ne.s32.totalorder %s203, %s205
      %p209 = scmp.eq.s32.totalorder %s22, 0
      %p210 = por %p208, %p209
      %p211 = scmp.ne.s32.totalorder %s203, %s205
      %p212 = scmp.eq.s32.totalorder %s27, 3
      %p213 = por %p211, %p212
      %p214 = scmp.ne.s32.totalorder %s205, %s206
      %p215 = scmp.eq.s32.totalorder %s27, 0
      %p216 = por %p214, %p215
      %p217 = scmp.ne.s32.totalorder %s205, %s206
      %p218 = scmp.eq.s32.totalorder %s28, 3
      %p219 = por %p217, %p218
      %p221 = scmp.ne.s32.totalorder %s206, %s220
      %p222 = scmp.eq.s32.totalorder %s28, 0
      %p223 = por %p221, %p222
      %s225 = sadd.s32 %s224, 1
      %p228 = scmp.eq.s32.totalorder %s22, 3
      %p229 = scmp.ne.s32.totalorder %s224, %s226
      %p230 = scmp.eq.s32.totalorder %s22, 0
      %p231 = por %p229, %p230
      %p232 = scmp.ne.s32.totalorder %s224, %s226
      %p233 = scmp.eq.s32.totalorder %s27, 3
      %p234 = por %p232, %p233
      %p235 = scmp.ne.s32.totalorder %s226, %s227
      %p236 = scmp.eq.s32.totalorder %s27, 0
      %p237 = por %p235, %p236
      %p238 = scmp.ne.s32.totalorder %s226, %s227
      %p239 = scmp.eq.s32.totalorder %s28, 3
      %p240 = por %p238, %p239
      %p242 = scmp.ne.s32.totalorder %s227, %s241
      %p243 = scmp.eq.s32.totalorder %s28, 0
      %p244 = por %p242, %p243
      %s246 = sadd.s32 %s245, 1
      %p249 = scmp.eq.s32.totalorder %s22, 3
      %p250 = scmp.ne.s32.totalorder %s245, %s247
      %p251 = scmp.eq.s32.totalorder %s22, 0
      %p252 = por %p250, %p251
      %p253 = scmp.ne.s32.totalorder %s245, %s247
      %p254 = scmp.eq.s32.totalorder %s27, 3
      %p255 = por %p253, %p254
      %p256 = scmp.ne.s32.totalorder %s247, %s248
      %p257 = scmp.eq.s32.totalorder %s27, 0
      %p258 = por %p256, %p257
      %p259 = scmp.ne.s32.totalorder %s247, %s248
      %p260 = scmp.eq.s32.totalorder %s28, 3
      %p261 = por %p259, %p260
      %p263 = scmp.ne.s32.totalorder %s248, %s262
      %p264 = scmp.eq.s32.totalorder %s28, 0
      %p265 = por %p263, %p264
      %s267 = sadd.s32 %s266, 1
      %p270 = scmp.eq.s32.totalorder %s22, 3
      %p271 = scmp.ne.s32.totalorder %s266, %s268
      %p272 = scmp.eq.s32.totalorder %s22, 0
      %p273 = por %p271, %p272
      %p274 = scmp.ne.s32.totalorder %s266, %s268
      %p275 = scmp.eq.s32.totalorder %s27, 3
      %p276 = por %p274, %p275
      %p277 = scmp.ne.s32.totalorder %s268, %s269
      %p278 = scmp.eq.s32.totalorder %s27, 0
      %p279 = por %p277, %p278
      %p280 = scmp.ne.s32.totalorder %s268, %s269
      %p281 = scmp.eq.s32.totalorder %s28, 3
      %p282 = por %p280, %p281
      %p284 = scmp.ne.s32.totalorder %s269, %s283
      %p285 = scmp.eq.s32.totalorder %s28, 0
      %p286 = por %p284, %p285
      %s288 = sadd.s32 %s287, 1
      %p291 = scmp.eq.s32.totalorder %s22, 3
      %p292 = scmp.ne.s32.totalorder %s287, %s289
      %p293 = scmp.eq.s32.totalorder %s22, 0
      %p294 = por %p292, %p293
      %p295 = scmp.ne.s32.totalorder %s287, %s289
      %p296 = scmp.eq.s32.totalorder %s27, 3
      %p297 = por %p295, %p296
      %p298 = scmp.ne.s32.totalorder %s289, %s290
      %p299 = scmp.eq.s32.totalorder %s27, 0
      %p300 = por %p298, %p299
      %p301 = scmp.ne.s32.totalorder %s289, %s290
      %p302 = scmp.eq.s32.totalorder %s28, 3
      %p303 = por %p301, %p302
      %p305 = scmp.ne.s32.totalorder %s290, %s304
      %p306 = scmp.eq.s32.totalorder %s28, 0
      %p307 = por %p305, %p306
      %s309 = sadd.s32 %s308, 1
      %p312 = scmp.eq.s32.totalorder %s22, 3
      %p313 = scmp.ne.s32.totalorder %s308, %s310
      %p314 = scmp.eq.s32.totalorder %s22, 0
      %p315 = por %p313, %p314
      %p316 = scmp.ne.s32.totalorder %s308, %s310
      %p317 = scmp.eq.s32.totalorder %s27, 3
      %p318 = por %p316, %p317
      %p319 = scmp.ne.s32.totalorder %s310, %s311
      %p320 = scmp.eq.s32.totalorder %s27, 0
      %p321 = por %p319, %p320
      %p322 = scmp.ne.s32.totalorder %s310, %s311
      %p323 = scmp.eq.s32.totalorder %s28, 3
      %p324 = por %p322, %p323
      %p326 = scmp.ne.s32.totalorder %s311, %s325
      %p327 = scmp.eq.s32.totalorder %s28, 0
      %p328 = por %p326, %p327
      %s330 = sadd.s32 %s329, 1
      %p333 = scmp.eq.s32.totalorder %s22, 3
      %p334 = scmp.ne.s32.totalorder %s329, %s331
      %p335 = scmp.eq.s32.totalorder %s22, 0
      %p336 = por %p334, %p335
      %p337 = scmp.ne.s32.totalorder %s329, %s331
      %p338 = scmp.eq.s32.totalorder %s27, 3
      %p339 = por %p337, %p338
      %p340 = scmp.ne.s32.totalorder %s331, %s332
      %p341 = scmp.eq.s32.totalorder %s27, 0
      %p342 = por %p340, %p341
      %p343 = scmp.ne.s32.totalorder %s331, %s332
      %p344 = scmp.eq.s32.totalorder %s28, 3
      %p345 = por %p343, %p344
      %p347 = scmp.ne.s32.totalorder %s332, %s346
      %p348 = scmp.eq.s32.totalorder %s28, 0
      %p349 = por %p347, %p348
      %s351 = sadd.s32 %s350, 1
      %p354 = scmp.eq.s32.totalorder %s22, 3
      %p355 = scmp.ne.s32.totalorder %s350, %s352
      %p356 = scmp.eq.s32.totalorder %s22, 0
      %p357 = por %p355, %p356
      %p358 = scmp.ne.s32.totalorder %s350, %s352
      %p359 = scmp.eq.s32.totalorder %s27, 3
      %p360 = por %p358, %p359
      %p361 = scmp.ne.s32.totalorder %s352, %s353
      %p362 = scmp.eq.s32.totalorder %s27, 0
      %p363 = por %p361, %p362
      %p364 = scmp.ne.s32.totalorder %s352, %s353
      %p365 = scmp.eq.s32.totalorder %s28, 3
      %p366 = por %p364, %p365
      %p368 = scmp.ne.s32.totalorder %s353, %s367
      %p369 = scmp.eq.s32.totalorder %s28, 0
      %p370 = por %p368, %p369
      %p371 = scmp.le.s32.totalorder 1, %s22
      %p372 = scmp.lt.s32.totalorder %s22, 5
      %p373 = pnand %p371, %p372
      %p374 = pneg %p373
      // Predicated region
      $region9: #{tpu_custom_call.1} parent=5 // pred_check
        _
      $region10: #{tpu_custom_call.1} parent=5 // pred_check_branch
        %376 = sbr.rel (%p373) target = $region12
      $region11: #{tpu_custom_call.1} parent=5 // pred_region
        %s377 = ssub.s32 %s22, 1
        // Predicated region
        $region13: #{tpu_custom_call.1} parent=11 // pred_check
          %p378 = pneg %p69
        $region14: #{tpu_custom_call.1} parent=11 // pred_check_branch
          %380 = sbr.rel (%p378) target = $region16
        $region15: #{tpu_custom_call.1} parent=11 // pred_region
          _
        $region16: #{tpu_custom_call.1} parent=11 // pred_fallthru
          _
        // Predicated region
        $region17: #{tpu_custom_call.1} parent=11 // pred_check
          %p381 = pneg %p90
        $region18: #{tpu_custom_call.1} parent=11 // pred_check_branch
          %383 = sbr.rel (%p381) target = $region20
        $region19: #{tpu_custom_call.1} parent=11 // pred_region
          _
        $region20: #{tpu_custom_call.1} parent=11 // pred_fallthru
          _
        // Predicated region
        $region21: #{tpu_custom_call.1} parent=11 // pred_check
          %p384 = pneg %p111
        $region22: #{tpu_custom_call.1} parent=11 // pred_check_branch
          %386 = sbr.rel (%p384) target = $region24
        $region23: #{tpu_custom_call.1} parent=11 // pred_region
          _
        $region24: #{tpu_custom_call.1} parent=11 // pred_fallthru
          _
        // Predicated region
        $region25: #{tpu_custom_call.1} parent=11 // pred_check
          %p387 = pneg %p132
        $region26: #{tpu_custom_call.1} parent=11 // pred_check_branch
          %389 = sbr.rel (%p387) target = $region28
        $region27: #{tpu_custom_call.1} parent=11 // pred_region
          _
        $region28: #{tpu_custom_call.1} parent=11 // pred_fallthru
          _
        // Predicated region
        $region29: #{tpu_custom_call.1} parent=11 // pred_check
          %p390 = pneg %p153
        $region30: #{tpu_custom_call.1} parent=11 // pred_check_branch
          %392 = sbr.rel (%p390) target = $region32
        $region31: #{tpu_custom_call.1} parent=11 // pred_region
          _
        $region32: #{tpu_custom_call.1} parent=11 // pred_fallthru
          _
        // Predicated region
        $region33: #{tpu_custom_call.1} parent=11 // pred_check
          %p393 = pneg %p174
        $region34: #{tpu_custom_call.1} parent=11 // pred_check_branch
          %395 = sbr.rel (%p393) target = $region36
        $region35: #{tpu_custom_call.1} parent=11 // pred_region
          _
        $region36: #{tpu_custom_call.1} parent=11 // pred_fallthru
          _
        // Predicated region
        $region37: #{tpu_custom_call.1} parent=11 // pred_check
          %p396 = pneg %p195
        $region38: #{tpu_custom_call.1} parent=11 // pred_check_branch
          %398 = sbr.rel (%p396) target = $region40
        $region39: #{tpu_custom_call.1} parent=11 // pred_region
          _
        $region40: #{tpu_custom_call.1} parent=11 // pred_fallthru
          _
        // Predicated region
        $region41: #{tpu_custom_call.1} parent=11 // pred_check
          %p399 = pneg %p216
        $region42: #{tpu_custom_call.1} parent=11 // pred_check_branch
          %401 = sbr.rel (%p399) target = $region44
        $region43: #{tpu_custom_call.1} parent=11 // pred_region
          _
        $region44: #{tpu_custom_call.1} parent=11 // pred_fallthru
          _
        // Predicated region
        $region45: #{tpu_custom_call.1} parent=11 // pred_check
          %p402 = pneg %p237
        $region46: #{tpu_custom_call.1} parent=11 // pred_check_branch
          %404 = sbr.rel (%p402) target = $region48
        $region47: #{tpu_custom_call.1} parent=11 // pred_region
          _
        $region48: #{tpu_custom_call.1} parent=11 // pred_fallthru
          _
        // Predicated region
        $region49: #{tpu_custom_call.1} parent=11 // pred_check
          %p405 = pneg %p258
        $region50: #{tpu_custom_call.1} parent=11 // pred_check_branch
          %407 = sbr.rel (%p405) target = $region52
        $region51: #{tpu_custom_call.1} parent=11 // pred_region
          _
        $region52: #{tpu_custom_call.1} parent=11 // pred_fallthru
          _
        // Predicated region
        $region53: #{tpu_custom_call.1} parent=11 // pred_check
          %p408 = pneg %p279
        $region54: #{tpu_custom_call.1} parent=11 // pred_check_branch
          %410 = sbr.rel (%p408) target = $region56
        $region55: #{tpu_custom_call.1} parent=11 // pred_region
          _
        $region56: #{tpu_custom_call.1} parent=11 // pred_fallthru
          _
        // Predicated region
        $region57: #{tpu_custom_call.1} parent=11 // pred_check
          %p411 = pneg %p300
        $region58: #{tpu_custom_call.1} parent=11 // pred_check_branch
          %413 = sbr.rel (%p411) target = $region60
        $region59: #{tpu_custom_call.1} parent=11 // pred_region
          _
        $region60: #{tpu_custom_call.1} parent=11 // pred_fallthru
          _
        // Predicated region
        $region61: #{tpu_custom_call.1} parent=11 // pred_check
          %p414 = pneg %p321
        $region62: #{tpu_custom_call.1} parent=11 // pred_check_branch
          %416 = sbr.rel (%p414) target = $region64
        $region63: #{tpu_custom_call.1} parent=11 // pred_region
          _
        $region64: #{tpu_custom_call.1} parent=11 // pred_fallthru
          _
        // Predicated region
        $region65: #{tpu_custom_call.1} parent=11 // pred_check
          %p417 = pneg %p342
        $region66: #{tpu_custom_call.1} parent=11 // pred_check_branch
          %419 = sbr.rel (%p417) target = $region68
        $region67: #{tpu_custom_call.1} parent=11 // pred_region
          _
        $region68: #{tpu_custom_call.1} parent=11 // pred_fallthru
          _
      $region12: #{tpu_custom_call.1} parent=5 // pred_fallthru
        _
      %p420 = scmp.lt.s32.totalorder %s22, 4
      // Predicated region
      $region69: #{tpu_custom_call.1} parent=5 // pred_check
        %p421 = pneg %p420
      $region70: #{tpu_custom_call.1} parent=5 // pred_check_branch
        %423 = sbr.rel (%p421) target = $region72
      $region71: #{tpu_custom_call.1} parent=5 // pred_region
        // Predicated region
        $region73: #{tpu_custom_call.1} parent=71 // pred_check
          %p424 = pneg %p42
        $region74: #{tpu_custom_call.1} parent=71 // pred_check_branch
          %426 = sbr.rel (%p424) target = $region76
        $region75: #{tpu_custom_call.1} parent=71 // pred_region
          %s427 = smul.u32 4, %s22
          %p428 = scmp.lt.s32.totalorder %s427, 15
          %s429 = scalar_select %p428, %s427, 15
          %s430 = smul.addr %s429, 8
          %s431 = scalar_lea.vmem %s0, %s430
          %s432 = smul.u32 4, %s22
        $region76: #{tpu_custom_call.1} parent=71 // pred_fallthru
          _
      $region72: #{tpu_custom_call.1} parent=5 // pred_fallthru
        _
      %p433 = scmp.le.s32.totalorder 1, %s22
      %p434 = scmp.lt.s32.totalorder %s22, 5
      %p435 = pnand %p433, %p434
      %p436 = pneg %p435
      // Predicated region
      $region77: #{tpu_custom_call.1} parent=5 // pred_check
        _
      $region78: #{tpu_custom_call.1} parent=5 // pred_check_branch
        %438 = sbr.rel (%p435) target = $region80
      $region79: #{tpu_custom_call.1} parent=5 // pred_region
        %s439 = ssub.s32 %s22, 1
        %s440 = smul.u32 4, %s27
        %p441 = scmp.lt.s32.totalorder %s440, 15
        %s442 = scalar_select %p441, %s440, 15
        %s443 = smul.addr %s442, 8
        %s444 = scalar_lea.vmem %s0, %s443
        %p445 = pneg %p48
        %p446 = pneg %p45
        %p447 = pneg %p69
        %p448 = pneg %p66
        %p449 = pneg %p90
        %p450 = pneg %p87
        %p451 = pneg %p111
        %p452 = pneg %p108
        %p453 = pneg %p132
        %p454 = pneg %p129
        %p455 = pneg %p153
        %p456 = pneg %p150
        %p457 = pneg %p174
        %p458 = pneg %p171
        %p459 = pneg %p195
        %p460 = pneg %p192
        %p461 = pneg %p216
        %p462 = pneg %p213
        %p463 = pneg %p237
        %p464 = pneg %p234
        %p465 = pneg %p258
        %p466 = pneg %p255
        %p467 = pneg %p279
        %p468 = pneg %p276
        %p469 = pneg %p300
        %p470 = pneg %p297
        %p471 = pneg %p321
        %p472 = pneg %p318
        %p473 = pneg %p342
        %p474 = pneg %p339
        %p475 = pneg %p363
        %p476 = pneg %p360
        %s477 = smul.u32 4, %s27
        %p478 = scmp.lt.s32.totalorder %s477, 15
        %s479 = scalar_select %p478, %s477, 15
        %s480 = smul.addr %s479, 8
        %s481 = scalar_lea.vmem %s0, %s480
        %s482 = smul.u32 4, %s27
        %p483 = scmp.eq.s32.totalorder %s27, 0
        // Predicated region
        $region81: #{tpu_custom_call.1} parent=79 // pred_check
          %p484 = pneg %p483
        $region82: #{tpu_custom_call.1} parent=79 // pred_check_branch
          %486 = sbr.rel (%p484) target = $region84
        $region83: #{tpu_custom_call.1} parent=79 // pred_region
          %vm487 = vcmask 256000
          %488 = vst.msk [vmem:[#allocation2] sm:$0x7] %vm487, 0.0
        $region84: #{tpu_custom_call.1} parent=79 // pred_fallthru
          _
        %v489 = vld [vmem:[%s481] sm:$0xff]
        %v490 = vld [vmem:[%s481 + $0x8] sm:$0xff]
        %v491 = vld [vmem:[%s481 + $0x10] sm:$0xff]
        %v492 = vld [vmem:[%s481 + $0x18] sm:$0xff]
        %v493 = vld [vmem:[%s3] sm:$0xf]
        %v494 = vld [vmem:[%s4] sm:$0x1]
        %v496 = vlaneseq
        %v497 = vshrl.u32 %v496, 7
        %v498 = vsub.s32 0, %v497
        %v499 = vrot.slane %v494, %v498
        %vm501 = vcmask 31744
        %v503 = vsel %vm501, %v489, 0
        %v506 = vsel %vm501, %v490, 0
        %v509 = vsel %vm501, %v491, 0
        %v512 = vsel %vm501, %v492, 0
        %vm514 = vcmask 1043456
        %v516 = vsel %vm514, %v493, 0
        %518 = vmatprep.subr.mxu0 0.0
        %519 = vmatpush1.msra.mxu0 %v516
        %520 = vmatprep.subr.mxu0 0.0
        %521 = vmatpush1.msra.mxu0 0.0
        %522 = vmatprep.subr.mxu0 0.0
        %523 = vmatpush1.msra.mxu0 0.0
        %524 = vmatprep.subr.mxu0 0.0
        %525 = vmatpush1.msra.mxu0 0.0
        %526 = vmatprep.subr.mxu0 0.0
        %527 = vmatpush1.msra.mxu0 0.0
        %528 = vmatprep.subr.mxu0 0.0
        %529 = vmatpush1.msra.mxu0 0.0
        %530 = vmatprep.subr.mxu0 0.0
        %531 = vmatpush1.msra.mxu0 0.0
        %532 = vmatprep.subr.mxu0 0.0
        %533 = vmatpush1.msra.mxu0 0.0
        %534 = vmatprep.subr.mxu0 0.0
        %535 = vmatpush1.msra.mxu0 0.0
        %536 = vmatprep.subr.mxu0 0.0
        %537 = vmatpush1.msra.mxu0 0.0
        %538 = vmatprep.subr.mxu0 0.0
        %539 = vmatpush1.msra.mxu0 0.0
        %540 = vmatprep.subr.mxu0 0.0
        %541 = vmatpush1.msra.mxu0 0.0
        %542 = vmatprep.subr.mxu0 0.0
        %543 = vmatpush1.msra.mxu0 0.0
        %544 = vmatprep.subr.mxu0 0.0
        %545 = vmatpush1.msra.mxu0 0.0
        %546 = vmatprep.subr.mxu0 0.0
        %547 = vmatpush1.msra.mxu0 0.0
        %548 = vmatprep.subr.mxu0 0.0
        %549 = vmatpush1.msra.mxu0 0.0
        %550 = vmatprep.subr.mxu0 0.0
        %551 = vmatpush1.msra.mxu0 0.0
        %552 = vmatprep.subr.mxu0 0.0
        %553 = vmatpush1.msra.mxu0 0.0
        %554 = vmatprep.subr.mxu0 0.0
        %555 = vmatpush1.msra.mxu0 0.0
        %556 = vmatprep.subr.mxu0 0.0
        %557 = vmatpush1.msra.mxu0 0.0
        %558 = vmatprep.subr.mxu0 0.0
        %559 = vmatpush1.msra.mxu0 0.0
        %560 = vmatprep.subr.mxu0 0.0
        %561 = vmatpush1.msra.mxu0 0.0
        %562 = vmatprep.subr.mxu0 0.0
        %563 = vmatpush1.msra.mxu0 0.0
        %564 = vmatprep.subr.mxu0 0.0
        %565 = vmatpush1.msra.mxu0 0.0
        %566 = vmatprep.subr.mxu0 0.0
        %567 = vmatpush1.msra.mxu0 0.0
        %568 = vmatprep.subr.mxu0 0.0
        %569 = vmatpush1.msra.mxu0 0.0
        %570 = vmatprep.subr.mxu0 0.0
        %571 = vmatpush1.msra.mxu0 0.0
        %572 = vmatprep.subr.mxu0 0.0
        %573 = vmatpush1.msra.mxu0 0.0
        %574 = vmatprep.subr.mxu0 0.0
        %575 = vmatpush1.msra.mxu0 0.0
        %576 = vmatprep.subr.mxu0 0.0
        %577 = vmatpush1.msra.mxu0 0.0
        %578 = vmatprep.subr.mxu0 0.0
        %579 = vmatpush1.msra.mxu0 0.0
        %580 = vmatprep.subr.mxu0 0.0
        %581 = vmatpush1.msra.mxu0 0.0
        %582 = vmatprep.mubr.f32.mxu0 0.0
        %583 = vmatmul.mubr.f32.gmra.mrb[0].mxu0 %v503
        %v584 = vpop.f32.mrb[0].mxu0
        %v585 = vadd.f32 %v499, %v584
        %v586 = vpop.f32.mrb[0].mxu0
        %587 = vmatprep.mubr.f32.mxu0 0.0
        %588 = vmatmul.mubr.f32.gmra.mrb[0].mxu0 %v506
        %v589 = vpop.f32.mrb[0].mxu0
        %v590 = vadd.f32 %v499, %v589
        %v591 = vpop.f32.mrb[0].mxu0
        %592 = vmatprep.mubr.f32.mxu0 0.0
        %593 = vmatmul.mubr.f32.gmra.mrb[0].mxu0 %v509
        %v594 = vpop.f32.mrb[0].mxu0
        %v595 = vadd.f32 %v499, %v594
        %v596 = vpop.f32.mrb[0].mxu0
        %597 = vmatprep.mubr.f32.mxu0 0.0
        %598 = vmatmul.mubr.f32.gmra.mrb[0].mxu0 %v512
        %v599 = vpop.f32.mrb[0].mxu0
        %v600 = vadd.f32 %v499, %v599
        %v601 = vpop.f32.mrb[0].mxu0
        %602 = vdwg.mxu0
        %vm603 = vcmp.ge.f32.partialorder %v585, 0.0
        %vm604 = vcmp.ge.f32.partialorder %v590, 0.0
        %vm605 = vcmp.ge.f32.partialorder %v595, 0.0
        %vm606 = vcmp.ge.f32.partialorder %v600, 0.0
        %v607 = vmul.f32 %v585, 0.01
        %v608 = vmul.f32 %v590, 0.01
        %v609 = vmul.f32 %v595, 0.01
        %v610 = vmul.f32 %v600, 0.01
        %v611 = vsel %vm603, %v585, %v607
        %v612 = vsel %vm604, %v590, %v608
        %v613 = vsel %vm605, %v595, %v609
        %v614 = vsel %vm606, %v600, %v610
        %v615 = vld [vmem:[%s5] sm:$0xff]
        %v616 = vld [vmem:[%s5 + $0x8] sm:$0xff]
        %v617 = vld [vmem:[%s5 + $0x10] sm:$0xff]
        %v618 = vld [vmem:[%s5 + $0x18] sm:$0xff]
        %v619 = vld [vmem:[%s6] sm:$0x1]
        %v621 = vlaneseq
        %v622 = vshrl.u32 %v621, 7
        %v623 = vsub.s32 0, %v622
        %v624 = vrot.slane %v619, %v623
        %vm626 = vcmask 261120
        %v628 = vsel %vm626, %v611, 0
        %v631 = vsel %vm626, %v612, 0
        %v634 = vsel %vm626, %v613, 0
        %v637 = vsel %vm626, %v614, 0
        %639 = vmatprep.subr.mxu0 0.0
        %640 = vmatpush1.msra.mxu0 %v615
        %641 = vmatprep.subr.mxu0 0.0
        %642 = vmatpush1.msra.mxu0 %v616
        %643 = vmatprep.subr.mxu0 0.0
        %644 = vmatpush1.msra.mxu0 %v617
        %645 = vmatprep.subr.mxu0 0.0
        %646 = vmatpush1.msra.mxu0 %v618
        %647 = vmatprep.subr.mxu0 0.0
        %648 = vmatpush1.msra.mxu0 0.0
        %649 = vmatprep.subr.mxu0 0.0
        %650 = vmatpush1.msra.mxu0 0.0
        %651 = vmatprep.subr.mxu0 0.0
        %652 = vmatpush1.msra.mxu0 0.0
        %653 = vmatprep.subr.mxu0 0.0
        %654 = vmatpush1.msra.mxu0 0.0
        %655 = vmatprep.subr.mxu0 0.0
        %656 = vmatpush1.msra.mxu0 0.0
        %657 = vmatprep.subr.mxu0 0.0
        %658 = vmatpush1.msra.mxu0 0.0
        %659 = vmatprep.subr.mxu0 0.0
        %660 = vmatpush1.msra.mxu0 0.0
        %661 = vmatprep.subr.mxu0 0.0
        %662 = vmatpush1.msra.mxu0 0.0
        %663 = vmatprep.subr.mxu0 0.0
        %664 = vmatpush1.msra.mxu0 0.0
        %665 = vmatprep.subr.mxu0 0.0
        %666 = vmatpush1.msra.mxu0 0.0
        %667 = vmatprep.subr.mxu0 0.0
        %668 = vmatpush1.msra.mxu0 0.0
        %669 = vmatprep.subr.mxu0 0.0
        %670 = vmatpush1.msra.mxu0 0.0
        %671 = vmatprep.subr.mxu0 0.0
        %672 = vmatpush1.msra.mxu0 0.0
        %673 = vmatprep.subr.mxu0 0.0
        %674 = vmatpush1.msra.mxu0 0.0
        %675 = vmatprep.subr.mxu0 0.0
        %676 = vmatpush1.msra.mxu0 0.0
        %677 = vmatprep.subr.mxu0 0.0
        %678 = vmatpush1.msra.mxu0 0.0
        %679 = vmatprep.subr.mxu0 0.0
        %680 = vmatpush1.msra.mxu0 0.0
        %681 = vmatprep.subr.mxu0 0.0
        %682 = vmatpush1.msra.mxu0 0.0
        %683 = vmatprep.subr.mxu0 0.0
        %684 = vmatpush1.msra.mxu0 0.0
        %685 = vmatprep.subr.mxu0 0.0
        %686 = vmatpush1.msra.mxu0 0.0
        %687 = vmatprep.subr.mxu0 0.0
        %688 = vmatpush1.msra.mxu0 0.0
        %689 = vmatprep.subr.mxu0 0.0
        %690 = vmatpush1.msra.mxu0 0.0
        %691 = vmatprep.subr.mxu0 0.0
        %692 = vmatpush1.msra.mxu0 0.0
        %693 = vmatprep.subr.mxu0 0.0
        %694 = vmatpush1.msra.mxu0 0.0
        %695 = vmatprep.subr.mxu0 0.0
        %696 = vmatpush1.msra.mxu0 0.0
        %697 = vmatprep.subr.mxu0 0.0
        %698 = vmatpush1.msra.mxu0 0.0
        %699 = vmatprep.subr.mxu0 0.0
        %700 = vmatpush1.msra.mxu0 0.0
        %701 = vmatprep.subr.mxu0 0.0
        %702 = vmatpush1.msra.mxu0 0.0
        %703 = vmatprep.mubr.f32.mxu0 0.0
        %704 = vmatmul.mubr.f32.gmra.mrb[0].mxu0 %v628
        %v705 = vpop.f32.mrb[0].mxu0
        %v706 = vadd.f32 %v624, %v705
        %v707 = vpop.f32.mrb[0].mxu0
        %708 = vmatprep.mubr.f32.mxu0 0.0
        %709 = vmatmul.mubr.f32.gmra.mrb[0].mxu0 %v631
        %v710 = vpop.f32.mrb[0].mxu0
        %v711 = vadd.f32 %v624, %v710
        %v712 = vpop.f32.mrb[0].mxu0
        %713 = vmatprep.mubr.f32.mxu0 0.0
        %714 = vmatmul.mubr.f32.gmra.mrb[0].mxu0 %v634
        %v715 = vpop.f32.mrb[0].mxu0
        %v716 = vadd.f32 %v624, %v715
        %v717 = vpop.f32.mrb[0].mxu0
        %718 = vmatprep.mubr.f32.mxu0 0.0
        %719 = vmatmul.mubr.f32.gmra.mrb[0].mxu0 %v637
        %v720 = vpop.f32.mrb[0].mxu0
        %v721 = vadd.f32 %v624, %v720
        %v722 = vpop.f32.mrb[0].mxu0
        %723 = vdwg.mxu0
        %vm724 = vcmp.ge.f32.partialorder %v706, 0.0
        %vm725 = vcmp.ge.f32.partialorder %v711, 0.0
        %vm726 = vcmp.ge.f32.partialorder %v716, 0.0
        %vm727 = vcmp.ge.f32.partialorder %v721, 0.0
        %v728 = vmul.f32 %v706, 0.01
        %v729 = vmul.f32 %v711, 0.01
        %v730 = vmul.f32 %v716, 0.01
        %v731 = vmul.f32 %v721, 0.01
        %v732 = vsel %vm724, %v706, %v728
        %v733 = vsel %vm725, %v711, %v729
        %v734 = vsel %vm726, %v716, %v730
        %v735 = vsel %vm727, %v721, %v731
        %v736 = vld [vmem:[%s7] sm:$0xff]
        %v737 = vld [vmem:[%s7 + $0x8] sm:$0xff]
        %v738 = vld [vmem:[%s7 + $0x10] sm:$0xff]
        %v739 = vld [vmem:[%s7 + $0x18] sm:$0xff]
        %v740 = vld [vmem:[%s8] sm:$0x1]
        %v742 = vlaneseq
        %v743 = vshrl.u32 %v742, 7
        %v744 = vsub.s32 0, %v743
        %v745 = vrot.slane %v740, %v744
        %v748 = vsel %vm626, %v732, 0
        %v751 = vsel %vm626, %v733, 0
        %v754 = vsel %vm626, %v734, 0
        %v757 = vsel %vm626, %v735, 0
        %759 = vmatprep.subr.mxu0 0.0
        %760 = vmatpush1.msra.mxu0 %v736
        %761 = vmatprep.subr.mxu0 0.0
        %762 = vmatpush1.msra.mxu0 %v737
        %763 = vmatprep.subr.mxu0 0.0
        %764 = vmatpush1.msra.mxu0 %v738
        %765 = vmatprep.subr.mxu0 0.0
        %766 = vmatpush1.msra.mxu0 %v739
        %767 = vmatprep.subr.mxu0 0.0
        %768 = vmatpush1.msra.mxu0 0.0
        %769 = vmatprep.subr.mxu0 0.0
        %770 = vmatpush1.msra.mxu0 0.0
        %771 = vmatprep.subr.mxu0 0.0
        %772 = vmatpush1.msra.mxu0 0.0
        %773 = vmatprep.subr.mxu0 0.0
        %774 = vmatpush1.msra.mxu0 0.0
        %775 = vmatprep.subr.mxu0 0.0
        %776 = vmatpush1.msra.mxu0 0.0
        %777 = vmatprep.subr.mxu0 0.0
        %778 = vmatpush1.msra.mxu0 0.0
        %779 = vmatprep.subr.mxu0 0.0
        %780 = vmatpush1.msra.mxu0 0.0
        %781 = vmatprep.subr.mxu0 0.0
        %782 = vmatpush1.msra.mxu0 0.0
        %783 = vmatprep.subr.mxu0 0.0
        %784 = vmatpush1.msra.mxu0 0.0
        %785 = vmatprep.subr.mxu0 0.0
        %786 = vmatpush1.msra.mxu0 0.0
        %787 = vmatprep.subr.mxu0 0.0
        %788 = vmatpush1.msra.mxu0 0.0
        %789 = vmatprep.subr.mxu0 0.0
        %790 = vmatpush1.msra.mxu0 0.0
        %791 = vmatprep.subr.mxu0 0.0
        %792 = vmatpush1.msra.mxu0 0.0
        %793 = vmatprep.subr.mxu0 0.0
        %794 = vmatpush1.msra.mxu0 0.0
        %795 = vmatprep.subr.mxu0 0.0
        %796 = vmatpush1.msra.mxu0 0.0
        %797 = vmatprep.subr.mxu0 0.0
        %798 = vmatpush1.msra.mxu0 0.0
        %799 = vmatprep.subr.mxu0 0.0
        %800 = vmatpush1.msra.mxu0 0.0
        %801 = vmatprep.subr.mxu0 0.0
        %802 = vmatpush1.msra.mxu0 0.0
        %803 = vmatprep.subr.mxu0 0.0
        %804 = vmatpush1.msra.mxu0 0.0
        %805 = vmatprep.subr.mxu0 0.0
        %806 = vmatpush1.msra.mxu0 0.0
        %807 = vmatprep.subr.mxu0 0.0
        %808 = vmatpush1.msra.mxu0 0.0
        %809 = vmatprep.subr.mxu0 0.0
        %810 = vmatpush1.msra.mxu0 0.0
        %811 = vmatprep.subr.mxu0 0.0
        %812 = vmatpush1.msra.mxu0 0.0
        %813 = vmatprep.subr.mxu0 0.0
        %814 = vmatpush1.msra.mxu0 0.0
        %815 = vmatprep.subr.mxu0 0.0
        %816 = vmatpush1.msra.mxu0 0.0
        %817 = vmatprep.subr.mxu0 0.0
        %818 = vmatpush1.msra.mxu0 0.0
        %819 = vmatprep.subr.mxu0 0.0
        %820 = vmatpush1.msra.mxu0 0.0
        %821 = vmatprep.subr.mxu0 0.0
        %822 = vmatpush1.msra.mxu0 0.0
        %823 = vmatprep.mubr.f32.mxu0 0.0
        %824 = vmatmul.mubr.f32.gmra.mrb[0].mxu0 %v748
        %v825 = vpop.f32.mrb[0].mxu0
        %v826 = vadd.f32 %v745, %v825
        %v827 = vpop.f32.mrb[0].mxu0
        %828 = vmatprep.mubr.f32.mxu0 0.0
        %829 = vmatmul.mubr.f32.gmra.mrb[0].mxu0 %v751
        %v830 = vpop.f32.mrb[0].mxu0
        %v831 = vadd.f32 %v745, %v830
        %v832 = vpop.f32.mrb[0].mxu0
        %833 = vmatprep.mubr.f32.mxu0 0.0
        %834 = vmatmul.mubr.f32.gmra.mrb[0].mxu0 %v754
        %v835 = vpop.f32.mrb[0].mxu0
        %v836 = vadd.f32 %v745, %v835
        %v837 = vpop.f32.mrb[0].mxu0
        %838 = vmatprep.mubr.f32.mxu0 0.0
        %839 = vmatmul.mubr.f32.gmra.mrb[0].mxu0 %v757
        %v840 = vpop.f32.mrb[0].mxu0
        %v841 = vadd.f32 %v745, %v840
        %v842 = vpop.f32.mrb[0].mxu0
        %843 = vdwg.mxu0
        %v844 = vld [vmem:[%s1] sm:$0x7]
        %v845 = vld [vmem:[%s2] sm:$0x7]
        %v846 = vlaneseq
        %v847 = vand.u32 %v846, 127
        %s848 = smul.u32 %s27, 32
        %v849 = vstv %s848
        %v850 = vadd.s32 %v847, %v849
        %851 = vset.pattern.permute.xlu0 0
        %852 = vperm.xlu0 %851, %v844
        %v853 = vpop.permute.xlu0 %852
        %vm854 = vcmp.ge.s32.totalorder %v850, %v853
        %855 = vset.pattern.permute.xlu0 0
        %856 = vperm.xlu0 %855, %v845
        %v857 = vpop.permute.xlu0 %856
        %vm858 = vcmp.lt.s32.totalorder %v850, %v857
        %vm859 = vmand %vm854, %vm858
        %v860 = vsel %vm859, 1, 0
        %v861 = vcvt.s32.f32 %v860
        %v862 = vld [vmem:[#allocation2] sm:$0x7]
        %v864 = vsel %vm626, %v861, 0
        %866 = vmatprep.subr.mxu0 0.0
        %867 = vmatpush1.msra.mxu0 %v826
        %868 = vmatprep.subr.mxu0 0.0
        %869 = vmatpush1.msra.mxu0 %v831
        %870 = vmatprep.subr.mxu0 0.0
        %871 = vmatpush1.msra.mxu0 %v836
        %872 = vmatprep.subr.mxu0 0.0
        %873 = vmatpush1.msra.mxu0 %v841
        %874 = vmatprep.subr.mxu0 0.0
        %875 = vmatpush1.msra.mxu0 0.0
        %876 = vmatprep.subr.mxu0 0.0
        %877 = vmatpush1.msra.mxu0 0.0
        %878 = vmatprep.subr.mxu0 0.0
        %879 = vmatpush1.msra.mxu0 0.0
        %880 = vmatprep.subr.mxu0 0.0
        %881 = vmatpush1.msra.mxu0 0.0
        %882 = vmatprep.subr.mxu0 0.0
        %883 = vmatpush1.msra.mxu0 0.0
        %884 = vmatprep.subr.mxu0 0.0
        %885 = vmatpush1.msra.mxu0 0.0
        %886 = vmatprep.subr.mxu0 0.0
        %887 = vmatpush1.msra.mxu0 0.0
        %888 = vmatprep.subr.mxu0 0.0
        %889 = vmatpush1.msra.mxu0 0.0
        %890 = vmatprep.subr.mxu0 0.0
        %891 = vmatpush1.msra.mxu0 0.0
        %892 = vmatprep.subr.mxu0 0.0
        %893 = vmatpush1.msra.mxu0 0.0
        %894 = vmatprep.subr.mxu0 0.0
        %895 = vmatpush1.msra.mxu0 0.0
        %896 = vmatprep.subr.mxu0 0.0
        %897 = vmatpush1.msra.mxu0 0.0
        %898 = vmatprep.subr.mxu0 0.0
        %899 = vmatpush1.msra.mxu0 0.0
        %900 = vmatprep.subr.mxu0 0.0
        %901 = vmatpush1.msra.mxu0 0.0
        %902 = vmatprep.subr.mxu0 0.0
        %903 = vmatpush1.msra.mxu0 0.0
        %904 = vmatprep.subr.mxu0 0.0
        %905 = vmatpush1.msra.mxu0 0.0
        %906 = vmatprep.subr.mxu0 0.0
        %907 = vmatpush1.msra.mxu0 0.0
        %908 = vmatprep.subr.mxu0 0.0
        %909 = vmatpush1.msra.mxu0 0.0
        %910 = vmatprep.subr.mxu0 0.0
        %911 = vmatpush1.msra.mxu0 0.0
        %912 = vmatprep.subr.mxu0 0.0
        %913 = vmatpush1.msra.mxu0 0.0
        %914 = vmatprep.subr.mxu0 0.0
        %915 = vmatpush1.msra.mxu0 0.0
        %916 = vmatprep.subr.mxu0 0.0
        %917 = vmatpush1.msra.mxu0 0.0
        %918 = vmatprep.subr.mxu0 0.0
        %919 = vmatpush1.msra.mxu0 0.0
        %920 = vmatprep.subr.mxu0 0.0
        %921 = vmatpush1.msra.mxu0 0.0
        %922 = vmatprep.subr.mxu0 0.0
        %923 = vmatpush1.msra.mxu0 0.0
        %924 = vmatprep.subr.mxu0 0.0
        %925 = vmatpush1.msra.mxu0 0.0
        %926 = vmatprep.subr.mxu0 0.0
        %927 = vmatpush1.msra.mxu0 0.0
        %928 = vmatprep.subr.mxu0 0.0
        %929 = vmatpush1.msra.mxu0 0.0
        %930 = vmatprep.mubr.f32.mxu0 0.0
        %931 = vmatmul.mubr.f32.gmra.mrb[0].mxu0 %v864
        %v932 = vpop.f32.mrb[0].mxu0
        %v933 = vadd.f32 0.0, %v932
        %v934 = vpop.f32.mrb[0].mxu0
        %935 = vdwg.mxu0
        %v936 = vadd.f32 %v862, %v933
        %vm937 = vcmask 256000
        %938 = vst.msk [vmem:[#allocation2] sm:$0x7] %vm937, %v936
        %p939 = scmp.eq.s32.totalorder %s27, 3
        // Predicated region
        $region85: #{tpu_custom_call.1} parent=79 // pred_check
          %p940 = pneg %p939
        $region86: #{tpu_custom_call.1} parent=79 // pred_check_branch
          %942 = sbr.rel (%p940) target = $region88
        $region87: #{tpu_custom_call.1} parent=79 // pred_region
          %v943 = vsub.s32 %v845, %v844
          %v944 = vcvt.s32.f32 %v943
          %v945 = vmax.f32 %v944, 1.0
          %v946 = vld [vmem:[#allocation2] sm:$0x7]
          %v947 = vrcp.pop %v945
          %949 = vset.pattern.permute.xlu0 0
          %950 = vperm.xlu0 %949, %v947
          %v951 = vpop.permute.xlu0 %950
          %v953 = vmul.f32 %v946, %v951
          %v954 = vld [vmem:[%s9] sm:$0xff]
          %v955 = vld [vmem:[%s9 + $0x8] sm:$0xff]
          %v956 = vld [vmem:[%s9 + $0x10] sm:$0xff]
          %v957 = vld [vmem:[%s9 + $0x18] sm:$0xff]
          %v958 = vld [vmem:[%s10] sm:$0x1]
          %v960 = vlaneseq
          %v961 = vshrl.u32 %v960, 7
          %v962 = vsub.s32 0, %v961
          %v963 = vrot.slane %v958, %v962
          %v966 = vsel %vm626, %v953, 0
          %968 = vmatprep.subr.mxu0 0.0
          %969 = vmatpush1.msra.mxu0 %v954
          %970 = vmatprep.subr.mxu0 0.0
          %971 = vmatpush1.msra.mxu0 %v955
          %972 = vmatprep.subr.mxu0 0.0
          %973 = vmatpush1.msra.mxu0 %v956
          %974 = vmatprep.subr.mxu0 0.0
          %975 = vmatpush1.msra.mxu0 %v957
          %976 = vmatprep.subr.mxu0 0.0
          %977 = vmatpush1.msra.mxu0 0.0
          %978 = vmatprep.subr.mxu0 0.0
          %979 = vmatpush1.msra.mxu0 0.0
          %980 = vmatprep.subr.mxu0 0.0
          %981 = vmatpush1.msra.mxu0 0.0
          %982 = vmatprep.subr.mxu0 0.0
          %983 = vmatpush1.msra.mxu0 0.0
          %984 = vmatprep.subr.mxu0 0.0
          %985 = vmatpush1.msra.mxu0 0.0
          %986 = vmatprep.subr.mxu0 0.0
          %987 = vmatpush1.msra.mxu0 0.0
          %988 = vmatprep.subr.mxu0 0.0
          %989 = vmatpush1.msra.mxu0 0.0
          %990 = vmatprep.subr.mxu0 0.0
          %991 = vmatpush1.msra.mxu0 0.0
          %992 = vmatprep.subr.mxu0 0.0
          %993 = vmatpush1.msra.mxu0 0.0
          %994 = vmatprep.subr.mxu0 0.0
          %995 = vmatpush1.msra.mxu0 0.0
          %996 = vmatprep.subr.mxu0 0.0
          %997 = vmatpush1.msra.mxu0 0.0
          %998 = vmatprep.subr.mxu0 0.0
          %999 = vmatpush1.msra.mxu0 0.0
          %1000 = vmatprep.subr.mxu0 0.0
          %1001 = vmatpush1.msra.mxu0 0.0
          %1002 = vmatprep.subr.mxu0 0.0
          %1003 = vmatpush1.msra.mxu0 0.0
          %1004 = vmatprep.subr.mxu0 0.0
          %1005 = vmatpush1.msra.mxu0 0.0
          %1006 = vmatprep.subr.mxu0 0.0
          %1007 = vmatpush1.msra.mxu0 0.0
          %1008 = vmatprep.subr.mxu0 0.0
          %1009 = vmatpush1.msra.mxu0 0.0
          %1010 = vmatprep.subr.mxu0 0.0
          %1011 = vmatpush1.msra.mxu0 0.0
          %1012 = vmatprep.subr.mxu0 0.0
          %1013 = vmatpush1.msra.mxu0 0.0
          %1014 = vmatprep.subr.mxu0 0.0
          %1015 = vmatpush1.msra.mxu0 0.0
          %1016 = vmatprep.subr.mxu0 0.0
          %1017 = vmatpush1.msra.mxu0 0.0
          %1018 = vmatprep.subr.mxu0 0.0
          %1019 = vmatpush1.msra.mxu0 0.0
          %1020 = vmatprep.subr.mxu0 0.0
          %1021 = vmatpush1.msra.mxu0 0.0
          %1022 = vmatprep.subr.mxu0 0.0
          %1023 = vmatpush1.msra.mxu0 0.0
          %1024 = vmatprep.subr.mxu0 0.0
          %1025 = vmatpush1.msra.mxu0 0.0
          %1026 = vmatprep.subr.mxu0 0.0
          %1027 = vmatpush1.msra.mxu0 0.0
          %1028 = vmatprep.subr.mxu0 0.0
          %1029 = vmatpush1.msra.mxu0 0.0
          %1030 = vmatprep.subr.mxu0 0.0
          %1031 = vmatpush1.msra.mxu0 0.0
          %1032 = vmatprep.mubr.f32.mxu0 0.0
          %1033 = vmatmul.mubr.f32.gmra.mrb[0].mxu0 %v966
          %v1034 = vpop.f32.mrb[0].mxu0
          %v1035 = vadd.f32 %v963, %v1034
          %v1036 = vpop.f32.mrb[0].mxu0
          %1037 = vdwg.mxu0
          %vm1038 = vcmp.ge.f32.partialorder %v1035, 0.0
          %v1039 = vmul.f32 %v1035, 0.01
          %v1040 = vsel %vm1038, %v1035, %v1039
          %v1041 = vld [vmem:[%s11] sm:$0xff]
          %v1042 = vld [vmem:[%s11 + $0x8] sm:$0xff]
          %v1043 = vld [vmem:[%s11 + $0x10] sm:$0xff]
          %v1044 = vld [vmem:[%s11 + $0x18] sm:$0xff]
          %v1045 = vld [vmem:[%s12] sm:$0x1]
          %v1047 = vlaneseq
          %v1048 = vshrl.u32 %v1047, 7
          %v1049 = vsub.s32 0, %v1048
          %v1050 = vrot.slane %v1045, %v1049
          %v1053 = vsel %vm626, %v1040, 0
          %1055 = vmatprep.subr.mxu0 0.0
          %1056 = vmatpush1.msra.mxu0 %v1041
          %1057 = vmatprep.subr.mxu0 0.0
          %1058 = vmatpush1.msra.mxu0 %v1042
          %1059 = vmatprep.subr.mxu0 0.0
          %1060 = vmatpush1.msra.mxu0 %v1043
          %1061 = vmatprep.subr.mxu0 0.0
          %1062 = vmatpush1.msra.mxu0 %v1044
          %1063 = vmatprep.subr.mxu0 0.0
          %1064 = vmatpush1.msra.mxu0 0.0
          %1065 = vmatprep.subr.mxu0 0.0
          %1066 = vmatpush1.msra.mxu0 0.0
          %1067 = vmatprep.subr.mxu0 0.0
          %1068 = vmatpush1.msra.mxu0 0.0
          %1069 = vmatprep.subr.mxu0 0.0
          %1070 = vmatpush1.msra.mxu0 0.0
          %1071 = vmatprep.subr.mxu0 0.0
          %1072 = vmatpush1.msra.mxu0 0.0
          %1073 = vmatprep.subr.mxu0 0.0
          %1074 = vmatpush1.msra.mxu0 0.0
          %1075 = vmatprep.subr.mxu0 0.0
          %1076 = vmatpush1.msra.mxu0 0.0
          %1077 = vmatprep.subr.mxu0 0.0
          %1078 = vmatpush1.msra.mxu0 0.0
          %1079 = vmatprep.subr.mxu0 0.0
          %1080 = vmatpush1.msra.mxu0 0.0
          %1081 = vmatprep.subr.mxu0 0.0
          %1082 = vmatpush1.msra.mxu0 0.0
          %1083 = vmatprep.subr.mxu0 0.0
          %1084 = vmatpush1.msra.mxu0 0.0
          %1085 = vmatprep.subr.mxu0 0.0
          %1086 = vmatpush1.msra.mxu0 0.0
          %1087 = vmatprep.subr.mxu0 0.0
          %1088 = vmatpush1.msra.mxu0 0.0
          %1089 = vmatprep.subr.mxu0 0.0
          %1090 = vmatpush1.msra.mxu0 0.0
          %1091 = vmatprep.subr.mxu0 0.0
          %1092 = vmatpush1.msra.mxu0 0.0
          %1093 = vmatprep.subr.mxu0 0.0
          %1094 = vmatpush1.msra.mxu0 0.0
          %1095 = vmatprep.subr.mxu0 0.0
          %1096 = vmatpush1.msra.mxu0 0.0
          %1097 = vmatprep.subr.mxu0 0.0
          %1098 = vmatpush1.msra.mxu0 0.0
          %1099 = vmatprep.subr.mxu0 0.0
          %1100 = vmatpush1.msra.mxu0 0.0
          %1101 = vmatprep.subr.mxu0 0.0
          %1102 = vmatpush1.msra.mxu0 0.0
          %1103 = vmatprep.subr.mxu0 0.0
          %1104 = vmatpush1.msra.mxu0 0.0
          %1105 = vmatprep.subr.mxu0 0.0
          %1106 = vmatpush1.msra.mxu0 0.0
          %1107 = vmatprep.subr.mxu0 0.0
          %1108 = vmatpush1.msra.mxu0 0.0
          %1109 = vmatprep.subr.mxu0 0.0
          %1110 = vmatpush1.msra.mxu0 0.0
          %1111 = vmatprep.subr.mxu0 0.0
          %1112 = vmatpush1.msra.mxu0 0.0
          %1113 = vmatprep.subr.mxu0 0.0
          %1114 = vmatpush1.msra.mxu0 0.0
          %1115 = vmatprep.subr.mxu0 0.0
          %1116 = vmatpush1.msra.mxu0 0.0
          %1117 = vmatprep.subr.mxu0 0.0
          %1118 = vmatpush1.msra.mxu0 0.0
          %1119 = vmatprep.mubr.f32.mxu0 0.0
          %1120 = vmatmul.mubr.f32.gmra.mrb[0].mxu0 %v1053
          %v1121 = vpop.f32.mrb[0].mxu0
          %v1122 = vadd.f32 %v1050, %v1121
          %v1123 = vpop.f32.mrb[0].mxu0
          %1124 = vdwg.mxu0
          %vm1125 = vcmp.ge.f32.partialorder %v1122, 0.0
          %v1126 = vmul.f32 %v1122, 0.01
          %v1127 = vsel %vm1125, %v1122, %v1126
          %v1128 = vld [vmem:[%s13] sm:$0xff]
          %v1129 = vld [vmem:[%s13 + $0x8] sm:$0xff]
          %v1130 = vld [vmem:[%s14] sm:$0x1]
          %v1132 = vlaneseq
          %v1133 = vshrl.u32 %v1132, 7
          %v1134 = vsub.s32 0, %v1133
          %v1135 = vrot.slane %v1130, %v1134
          %vm1137 = vcmask 130048
          %v1139 = vsel %vm1137, %v1127, 0
          %1141 = vmatprep.subr.mxu0 0.0
          %1142 = vmatpush1.msra.mxu0 %v1128
          %1143 = vmatprep.subr.mxu0 0.0
          %1144 = vmatpush1.msra.mxu0 %v1129
          %1145 = vmatprep.subr.mxu0 0.0
          %1146 = vmatpush1.msra.mxu0 0.0
          %1147 = vmatprep.subr.mxu0 0.0
          %1148 = vmatpush1.msra.mxu0 0.0
          %1149 = vmatprep.subr.mxu0 0.0
          %1150 = vmatpush1.msra.mxu0 0.0
          %1151 = vmatprep.subr.mxu0 0.0
          %1152 = vmatpush1.msra.mxu0 0.0
          %1153 = vmatprep.subr.mxu0 0.0
          %1154 = vmatpush1.msra.mxu0 0.0
          %1155 = vmatprep.subr.mxu0 0.0
          %1156 = vmatpush1.msra.mxu0 0.0
          %1157 = vmatprep.subr.mxu0 0.0
          %1158 = vmatpush1.msra.mxu0 0.0
          %1159 = vmatprep.subr.mxu0 0.0
          %1160 = vmatpush1.msra.mxu0 0.0
          %1161 = vmatprep.subr.mxu0 0.0
          %1162 = vmatpush1.msra.mxu0 0.0
          %1163 = vmatprep.subr.mxu0 0.0
          %1164 = vmatpush1.msra.mxu0 0.0
          %1165 = vmatprep.subr.mxu0 0.0
          %1166 = vmatpush1.msra.mxu0 0.0
          %1167 = vmatprep.subr.mxu0 0.0
          %1168 = vmatpush1.msra.mxu0 0.0
          %1169 = vmatprep.subr.mxu0 0.0
          %1170 = vmatpush1.msra.mxu0 0.0
          %1171 = vmatprep.subr.mxu0 0.0
          %1172 = vmatpush1.msra.mxu0 0.0
          %1173 = vmatprep.subr.mxu0 0.0
          %1174 = vmatpush1.msra.mxu0 0.0
          %1175 = vmatprep.subr.mxu0 0.0
          %1176 = vmatpush1.msra.mxu0 0.0
          %1177 = vmatprep.subr.mxu0 0.0
          %1178 = vmatpush1.msra.mxu0 0.0
          %1179 = vmatprep.subr.mxu0 0.0
          %1180 = vmatpush1.msra.mxu0 0.0
          %1181 = vmatprep.subr.mxu0 0.0
          %1182 = vmatpush1.msra.mxu0 0.0
          %1183 = vmatprep.subr.mxu0 0.0
          %1184 = vmatpush1.msra.mxu0 0.0
          %1185 = vmatprep.subr.mxu0 0.0
          %1186 = vmatpush1.msra.mxu0 0.0
          %1187 = vmatprep.subr.mxu0 0.0
          %1188 = vmatpush1.msra.mxu0 0.0
          %1189 = vmatprep.subr.mxu0 0.0
          %1190 = vmatpush1.msra.mxu0 0.0
          %1191 = vmatprep.subr.mxu0 0.0
          %1192 = vmatpush1.msra.mxu0 0.0
          %1193 = vmatprep.subr.mxu0 0.0
          %1194 = vmatpush1.msra.mxu0 0.0
          %1195 = vmatprep.subr.mxu0 0.0
          %1196 = vmatpush1.msra.mxu0 0.0
          %1197 = vmatprep.subr.mxu0 0.0
          %1198 = vmatpush1.msra.mxu0 0.0
          %1199 = vmatprep.subr.mxu0 0.0
          %1200 = vmatpush1.msra.mxu0 0.0
          %1201 = vmatprep.subr.mxu0 0.0
          %1202 = vmatpush1.msra.mxu0 0.0
          %1203 = vmatprep.subr.mxu0 0.0
          %1204 = vmatpush1.msra.mxu0 0.0
          %1205 = vmatprep.mubr.f32.mxu0 0.0
          %1206 = vmatmul.mubr.f32.gmra.mrb[0].mxu0 %v1139
          %v1207 = vpop.f32.mrb[0].mxu0
          %v1208 = vadd.f32 %v1135, %v1207
          %v1209 = vpop.f32.mrb[0].mxu0
          %1210 = vdwg.mxu0
          %vm1211 = vcmask 124928
          %1212 = vst.msk [vmem:[#allocation3] sm:$0x7] %vm1211, %v1208
        $region88: #{tpu_custom_call.1} parent=79 // pred_fallthru
          _
        // Predicated region
        $region89: #{tpu_custom_call.1} parent=79 // pred_check
          %p1213 = pneg %p360
        $region90: #{tpu_custom_call.1} parent=79 // pred_check_branch
          %1215 = sbr.rel (%p1213) target = $region92
        $region91: #{tpu_custom_call.1} parent=79 // pred_region
          %s1217 = ssub.s32 64, 64
          %1218 = vsyncadd [#allocation4], %s1217
          %s1220 = sshll.u32 [#allocation3], 4
          %s1221 = int_to_ptr.vmem [resolvable:$true] %s1220
          %1223 = dma.vmem_to_hbm [thread:$0]  %s1221, 64, %s15, [#allocation4]
        $region92: #{tpu_custom_call.1} parent=79 // pred_fallthru
          _
        // Predicated region
        $region93: #{tpu_custom_call.1} parent=79 // pred_check
          %p1224 = pneg %p360
        $region94: #{tpu_custom_call.1} parent=79 // pred_check_branch
          %1226 = sbr.rel (%p1224) target = $region96
        $region95: #{tpu_custom_call.1} parent=79 // pred_region
          %1227 = dma.done [#allocation4], 64
        $region96: #{tpu_custom_call.1} parent=79 // pred_fallthru
          _
      $region80: #{tpu_custom_call.1} parent=5 // pred_fallthru
        _
      %p1228 = scmp.le.s32.totalorder 2, %s22
      // Predicated region
      $region97: #{tpu_custom_call.1} parent=5 // pred_check
        %p1229 = pneg %p1228
      $region98: #{tpu_custom_call.1} parent=5 // pred_check_branch
        %1231 = sbr.rel (%p1229) target = $region100
      $region99: #{tpu_custom_call.1} parent=5 // pred_region
        %s1232 = ssub.s32 %s22, 2
      $region100: #{tpu_custom_call.1} parent=5 // pred_fallthru
        _
    $region6: #{tpu_custom_call.1} parent=1 // loop_footer
      %s26 = sadd.s32 1, %s22
    $region7: #{tpu_custom_call.1} parent=1 // loop_footer_branch
      %21 = sbr.rel target = $region3
    $region8: #{tpu_custom_call.1} parent=1 // loop_exit
      _
    %1233 = vsyncpa [#allocation4], 1
    %s1234 = scalar_lea.sflag [#allocation4], 1
    %1235 = vsyncpa %s1234, 1

</llo_original>
